<compile_context>
chip_gen: v7x
topology: tpu7x:2x2x1
jax: 0.10.0
libtpu: 0.0.40
codegen_flags: <defaults>
</compile_context>

<pallas_src>
import functools

import jax
import jax.numpy as jnp
from jax.experimental import pallas as pl
from jax.experimental.pallas import tpu as pltpu


# ---------------------------------------------------------------------------
# Fused Pallas kernel: one batch group (bb batch elements in lanes) per step.
# ---------------------------------------------------------------------------
def _stconv_fused_kernel(x_ref, w1v_ref, w1g_ref, b1v_ref, b1g_ref,
                         th_ref, lk_ref, bs_ref, w2_ref, b2_ref,
                         mask_ref, gam_ref, bet_ref, pool_ref, poolt_ref,
                         o_ref, *, pad, n_nodes, eps):
    """Activations are channel-first flattened: (C, L), L = bb*T*N in lanes."""
    _, _, L = x_ref.shape
    kt = mask_ref.shape[0]
    c1 = bs_ref.shape[0]
    ks = lk_ref.shape[0]
    c2 = b2_ref.shape[0]
    bf16 = jnp.bfloat16

    def temporal_taps(h):
        # 'same' zero-padded temporal conv taps: XLU lane roll + boundary mask
        # (no dense (L, L) shift matmul).  Taps stacked along sublanes so the
        # whole conv is ONE MXU matmul with contraction depth kt*c_in.
        taps = []
        for dt in range(kt):                               # static tap loop
            if dt == pad:                                  # centre tap: no shift
                taps.append(h)
            else:
                shift = ((pad - dt) * n_nodes) % L
                taps.append(pltpu.roll(h, shift=shift, axis=1) * mask_ref[dt])
        return jnp.concatenate(taps, axis=0).astype(bf16)  # (kt*c_in, L)

    # ---- tconv1 (GLU): channel-zero-pad Align folded into value weights ----
    x = x_ref[0]                                           # (c0, L) f32
    h1 = temporal_taps(x)                                  # (kt*c0, L) bf16
    val = jnp.dot(w1v_ref[...], h1,
                  preferred_element_type=jnp.float32) + b1v_ref[...]
    gpre = jnp.dot(w1g_ref[...], h1,
                   preferred_element_type=jnp.float32) + b1g_ref[...]
    gate = pl.reciprocal(1.0 + jnp.exp(-gpre), approx=True)   # sigmoid on EUP
    x_t1 = val * gate                                      # (c1, L) f32

    # ---- sconv: Chebyshev graph conv + identity residual + relu -----------
    # All ks orders of theta^T fused into one matmul; the Lk contraction only
    # mixes lanes inside each (batch, time) node block.
    z = jnp.dot(th_ref[...], x_t1.astype(bf16),
                preferred_element_type=jnp.float32)        # (ks*c1, L)
    gc = jnp.zeros((c1, L), jnp.float32)
    for k in range(ks):                                    # static order loop
        zk = z[k * c1:(k + 1) * c1].astype(bf16)
        gc = gc + jnp.dot(zk, lk_ref[k], preferred_element_type=jnp.float32)
    x_s = jnp.maximum(gc + bs_ref[...] + x_t1, 0.0)        # (c1, L)

    # ---- tconv2 (relu): 1x1 Align (Wa, ba) folded into centre tap / bias ---
    h2 = temporal_taps(x_s)                                # (kt*c1, L) bf16
    x_t2 = jnp.maximum(
        jnp.dot(w2_ref[...], h2, preferred_element_type=jnp.float32)
        + b2_ref[...], 0.0)                                # (c2, L)

    # ---- LayerNorm over (N, c2) per (batch, time) --------------------------
    # Channel (sublane) reduce first, then the pooling matmuls with M=1.
    inv_cnt = 1.0 / float(n_nodes * c2)
    pool = pool_ref[...]                                   # (L, bbT)
    pool_t = poolt_ref[...]                                # (bbT, L)
    s1 = jnp.sum(x_t2, axis=0, keepdims=True)              # (1, L)
    mu = jnp.dot(jnp.dot(s1, pool, preferred_element_type=jnp.float32) * inv_cnt,
                 pool_t, preferred_element_type=jnp.float32)      # (1, L)
    d = x_t2 - mu
    s2 = jnp.sum(d * d, axis=0, keepdims=True)             # (1, L)
    var = jnp.dot(jnp.dot(s2, pool, preferred_element_type=jnp.float32) * inv_cnt,
                  pool_t, preferred_element_type=jnp.float32)     # (1, L)
    y = d * jax.lax.rsqrt(var + eps) * gam_ref[...] + bet_ref[...]

    # dropout: inference-mode identity
    o_ref[0] = y


# ---------------------------------------------------------------------------
# Wrapper: parameter folding / constant operators, one fused pallas_call.
# ---------------------------------------------------------------------------
def _pick_batch_group(batch, tn, max_lanes=1024):
    """Largest bb dividing `batch` with bb*tn lanes <= max_lanes while keeping
    >= 2 parallel grid steps (so v7x can still shard the grid over 2 TCs)."""
    bb = 1
    for d in range(1, batch + 1):
        if batch % d == 0 and d * tn <= max_lanes and batch // d >= 2:
            bb = d
    return bb


def stconv_block_forward(x_nchw, params, kt, ks):
    """x_nchw: (B, c0, T, N) -> (B, c2, T, N)."""
    B, c0, T, N = x_nchw.shape
    TN = T * N
    pad = (kt - 1) // 2
    c1 = params["b1"].shape[0] // 2
    c2 = params["b2"].shape[0]
    # Align folding below assumes the standard STGCN block channel pattern.
    assert c0 < c1 and c1 > c2, "expected c0 < c1 (pad align) and c1 > c2 (1x1 align)"

    f32, bf16 = jnp.float32, jnp.bfloat16

    # -- batch grouping: stack bb batch elements along the lane axis ---------
    bb = _pick_batch_group(B, TN)
    G = B // bb
    L = bb * TN
    bbT = bb * T
    x_g = (x_nchw.astype(f32).reshape(G, bb, c0, TN)
           .transpose(0, 2, 1, 3).reshape(G, c0, L))

    # -- tconv1 weights: split value/gate (no sublane slicing in-kernel),
    #    fold channel-zero-pad Align as identity on the centre tap of the
    #    value half, pack taps along the contraction dim, cast to bf16. -------
    W1 = params["W1"].astype(f32)                          # (2*c1, c0, kt)
    W1v = W1[:c1].at[:, :, pad].add(jnp.eye(c1, c0, dtype=f32))
    W1g = W1[c1:]
    w1v = jnp.transpose(W1v, (0, 2, 1)).reshape(c1, kt * c0).astype(bf16)
    w1g = jnp.transpose(W1g, (0, 2, 1)).reshape(c1, kt * c0).astype(bf16)
    b1v = params["b1"][:c1].reshape(c1, 1).astype(f32)
    b1g = params["b1"][c1:].reshape(c1, 1).astype(f32)

    # -- sconv operands: all Chebyshev orders stacked along output rows;
    #    graph operator as blockdiag_t(Lk^T) over the (batch, time) blocks
    #    (N = 16 < 128 here; see TODO in header for the lane-dense N path). --
    theta_cat = (jnp.transpose(params["theta"].astype(f32), (2, 1, 0))
                 .reshape(ks * c1, c1).astype(bf16))       # (ks*c1, c1)
    eye_bt = jnp.eye(bbT, dtype=f32)
    lk_blk = jnp.stack([jnp.kron(eye_bt, params["Lk"][k].T.astype(f32))
                        for k in range(ks)]).astype(bf16)  # (ks, L, L)
    b_s = params["b_s"].reshape(c1, 1).astype(f32)

    # -- tconv2 weights: fold the 1x1 Align conv into centre tap / bias ------
    W2 = params["W2"].astype(f32).at[:, :, pad].add(params["Wa"].astype(f32))
    w2 = jnp.transpose(W2, (0, 2, 1)).reshape(c2, kt * c1).astype(bf16)
    b2 = (params["b2"] + params["ba"]).reshape(c2, 1).astype(f32)

    # -- temporal boundary masks (replace the dense (L, L) shift matmuls) ----
    t_idx = (jnp.arange(L, dtype=jnp.int32) % TN) // N
    mask = jnp.stack([((t_idx + (dt - pad) >= 0) & (t_idx + (dt - pad) < T))
                      .astype(f32) for dt in range(kt)]).reshape(kt, 1, L)

    # -- LayerNorm affine (channel-first lanes) + (batch, time) pooling ------
    gamma_cf = jnp.tile(params["gamma"].T.astype(f32), (1, bbT))  # (c2, L)
    beta_cf = jnp.tile(params["beta"].T.astype(f32), (1, bbT))    # (c2, L)
    pool = jnp.kron(eye_bt, jnp.ones((N, 1), f32))                # (L, bbT)
    pool_t = pool.T                                               # (bbT, L)

    out_flat = pl.pallas_call(
        functools.partial(_stconv_fused_kernel, pad=pad, n_nodes=N, eps=1e-5),
        out_shape=jax.ShapeDtypeStruct((G, c2, L), f32),
        grid=(G,),
        in_specs=[
            pl.BlockSpec((1, c0, L), lambda g: (g, 0, 0)),        # x (batch group)
            pl.BlockSpec((c1, kt * c0), lambda g: (0, 0)),        # W1 value (+I fold)
            pl.BlockSpec((c1, kt * c0), lambda g: (0, 0)),        # W1 gate
            pl.BlockSpec((c1, 1), lambda g: (0, 0)),              # b1 value
            pl.BlockSpec((c1, 1), lambda g: (0, 0)),              # b1 gate
            pl.BlockSpec((ks * c1, c1), lambda g: (0, 0)),        # theta^T (all orders)
            pl.BlockSpec((ks, L, L), lambda g: (0, 0, 0)),        # blockdiag(Lk^T)
            pl.BlockSpec((c1, 1), lambda g: (0, 0)),              # b_s
            pl.BlockSpec((c2, kt * c1), lambda g: (0, 0)),        # W2 (+Wa fold)
            pl.BlockSpec((c2, 1), lambda g: (0, 0)),              # b2 (+ba)
            pl.BlockSpec((kt, 1, L), lambda g: (0, 0, 0)),        # temporal masks
            pl.BlockSpec((c2, L), lambda g: (0, 0)),              # gamma (cf layout)
            pl.BlockSpec((c2, L), lambda g: (0, 0)),              # beta  (cf layout)
            pl.BlockSpec((L, bbT), lambda g: (0, 0)),             # time/batch pooling
            pl.BlockSpec((bbT, L), lambda g: (0, 0)),             # pooling^T
        ],
        out_specs=pl.BlockSpec((1, c2, L), lambda g: (g, 0, 0)),
        compiler_params=pltpu.CompilerParams(
            dimension_semantics=("parallel",),           # batch groups -> 2 TCs on v7x
            vmem_limit_bytes=48 * 1024 * 1024),          # explicit v7x headroom
    )(x_g, w1v, w1g, b1v, b1g, theta_cat, lk_blk, b_s, w2, b2,
      mask, gamma_cf, beta_cf, pool, pool_t)

    return (out_flat.reshape(G, c2, bb, TN).transpose(0, 2, 1, 3)
            .reshape(B, c2, T, N))


# ---------------------------------------------------------------------------
# Pure-JAX reference (mirrors the PyTorch einsums/conv directly, NCHW, f32)
# ---------------------------------------------------------------------------
def reference_forward(x, params, kt, ks):
    def conv_time(x, W, b):                                          # W: (O, I, kt)
        Bb, I, T, N = x.shape
        pad = (kt - 1) // 2
        xp = jnp.pad(x, ((0, 0), (0, 0), (pad, pad), (0, 0)))
        out = jnp.zeros((Bb, W.shape[0], T, N), jnp.float32)
        for dt in range(kt):
            out = out + jnp.einsum("oi,bitn->botn", W[:, :, dt], xp[:, :, dt:dt + T, :])
        return out + b[None, :, None, None]

    c1 = params["b1"].shape[0] // 2
    x_in = jnp.pad(x, ((0, 0), (0, c1 - x.shape[1]), (0, 0), (0, 0)))
    xc = conv_time(x, params["W1"], params["b1"])
    x_t1 = (xc[:, :c1] + x_in) * jax.nn.sigmoid(xc[:, c1:])

    x_c = jnp.einsum("knm,bitm->bitkn", params["Lk"], x_t1)
    x_gc = jnp.einsum("iok,bitkn->botn", params["theta"], x_c) + params["b_s"][None, :, None, None]
    x_s = jax.nn.relu(x_gc + x_t1)

    x_in2 = jnp.einsum("oi,bitn->botn", params["Wa"], x_s) + params["ba"][None, :, None, None]
    x_t2 = jax.nn.relu(conv_time(x_s, params["W2"], params["b2"]) + x_in2)

    z = jnp.transpose(x_t2, (0, 2, 3, 1))
    mu = jnp.mean(z, axis=(2, 3), keepdims=True)
    var = jnp.mean((z - mu) ** 2, axis=(2, 3), keepdims=True)
    z = (z - mu) / jnp.sqrt(var + 1e-5) * params["gamma"] + params["beta"]
    return jnp.transpose(z, (0, 3, 1, 2))


# ---------------------------------------------------------------------------
if __name__ == "__main__":
    # Small shapes consistent with the module: ks=2, kt=3, n=16 nodes,
    # channels c=(4, 8, 6), T=8 time steps, batch B=2, dropout (eval mode).
    B, T, N = 2, 8, 16
    c0, c1, c2 = 4, 8, 6
    kt, ks = 3, 2

    key = jax.random.PRNGKey(0)
    keys = jax.random.split(key, 10)
    params = {
        "W1": 0.2 * jax.random.normal(keys[0], (2 * c1, c0, kt), jnp.float32),
        "b1": 0.1 * jax.random.normal(keys[1], (2 * c1,), jnp.float32),
        "theta": 0.2 * jax.random.normal(keys[2], (c1, c1, ks), jnp.float32),
        "b_s": 0.1 * jax.random.normal(keys[3], (c1,), jnp.float32),
        "Lk": 0.2 * jax.random.normal(keys[4], (ks, N, N), jnp.float32),
        "W2": 0.2 * jax.random.normal(keys[5], (c2, c1, kt), jnp.float32),
        "b2": 0.1 * jax.random.normal(keys[6], (c2,), jnp.float32),
        "Wa": 0.2 * jax.random.normal(keys[7], (c2, c1), jnp.float32),   # Align 1x1 (c1 > c2)
        "ba": 0.1 * jax.random.normal(keys[8], (c2,), jnp.float32),
        "gamma": jnp.ones((N, c2), jnp.float32),                         # LayerNorm defaults
        "beta": jnp.zeros((N, c2), jnp.float32),
    }

    x = jax.random.normal(keys[9], (B, c0, T, N), jnp.float32)

    fwd = jax.jit(functools.partial(stconv_block_forward, kt=kt, ks=ks))
    out = jax.block_until_ready(fwd(x, params))
    ref = jax.block_until_ready(reference_forward(x, params, kt, ks))

    assert out.shape == (B, c2, T, N), out.shape
    assert bool(jnp.all(jnp.isfinite(out)))
    # bf16 MXU operands + approx-EUP sigmoid give a small quantization drift
    # vs the pure-f32 reference (a few 1e-2 after LayerNorm rescaling);
    # structural bugs (wrong shift/mask/fold) would produce O(0.3 .. 1) errors.
    max_err = float(jnp.max(jnp.abs(out - ref)))
    assert max_err < 1e-1, f"mismatch vs reference: {max_err}"

    print("KERNEL_OK")
</pallas_src>

<mosaic_0001>
module attributes {stable_mosaic.version = 11 : i64} {
  func.func @_stconv_fused_kernel(%arg0: i32, %arg1: memref<1x4x128xf32, #tpu.memory_space<vmem>>, %arg2: memref<8x12xbf16, #tpu.memory_space<vmem>>, %arg3: memref<8x12xbf16, #tpu.memory_space<vmem>>, %arg4: memref<8x1xf32, #tpu.memory_space<vmem>>, %arg5: memref<8x1xf32, #tpu.memory_space<vmem>>, %arg6: memref<16x8xbf16, #tpu.memory_space<vmem>>, %arg7: memref<2x128x128xbf16, #tpu.memory_space<vmem>>, %arg8: memref<8x1xf32, #tpu.memory_space<vmem>>, %arg9: memref<6x24xbf16, #tpu.memory_space<vmem>>, %arg10: memref<6x1xf32, #tpu.memory_space<vmem>>, %arg11: memref<3x1x128xf32, #tpu.memory_space<vmem>>, %arg12: memref<6x128xf32, #tpu.memory_space<vmem>>, %arg13: memref<6x128xf32, #tpu.memory_space<vmem>>, %arg14: memref<128x8xf32, #tpu.memory_space<vmem>>, %arg15: memref<8x128xf32, #tpu.memory_space<vmem>>, %arg16: memref<1x6x128xf32, #tpu.memory_space<vmem>>) attributes {dimension_semantics = [#tpu.dimension_semantics<parallel>], iteration_bounds = array<i64: 2>, scalar_prefetch = 0 : i64, scratch_operands = 0 : i64, tpu.core_type = #tpu.core_type<tc>, window_params = [{transform_indices = @transform_0, window_bounds = array<i64: 1, 4, 128>}, {pipeline_mode = #tpu.pipeline_mode<synchronous>, transform_indices = @transform_1, window_bounds = array<i64: 8, 12>}, {pipeline_mode = #tpu.pipeline_mode<synchronous>, transform_indices = @transform_2, window_bounds = array<i64: 8, 12>}, {pipeline_mode = #tpu.pipeline_mode<synchronous>, transform_indices = @transform_3, window_bounds = array<i64: 8, 1>}, {pipeline_mode = #tpu.pipeline_mode<synchronous>, transform_indices = @transform_4, window_bounds = array<i64: 8, 1>}, {pipeline_mode = #tpu.pipeline_mode<synchronous>, transform_indices = @transform_5, window_bounds = array<i64: 16, 8>}, {pipeline_mode = #tpu.pipeline_mode<synchronous>, transform_indices = @transform_6, window_bounds = array<i64: 2, 128, 128>}, {pipeline_mode = #tpu.pipeline_mode<synchronous>, transform_indices = @transform_7, window_bounds = array<i64: 8, 1>}, {pipeline_mode = #tpu.pipeline_mode<synchronous>, transform_indices = @transform_8, window_bounds = array<i64: 6, 24>}, {pipeline_mode = #tpu.pipeline_mode<synchronous>, transform_indices = @transform_9, window_bounds = array<i64: 6, 1>}, {pipeline_mode = #tpu.pipeline_mode<synchronous>, transform_indices = @transform_10, window_bounds = array<i64: 3, 1, 128>}, {pipeline_mode = #tpu.pipeline_mode<synchronous>, transform_indices = @transform_11, window_bounds = array<i64: 6, 128>}, {pipeline_mode = #tpu.pipeline_mode<synchronous>, transform_indices = @transform_12, window_bounds = array<i64: 6, 128>}, {pipeline_mode = #tpu.pipeline_mode<synchronous>, transform_indices = @transform_13, window_bounds = array<i64: 128, 8>}, {pipeline_mode = #tpu.pipeline_mode<synchronous>, transform_indices = @transform_14, window_bounds = array<i64: 8, 128>}, {transform_indices = @transform_15, window_bounds = array<i64: 1, 6, 128>}]} {
    %c0 = arith.constant 0 : index
    %c0_0 = arith.constant 0 : index
    %c0_1 = arith.constant 0 : index
    %0 = vector.load %arg1[%c0, %c0_0, %c0_1] : memref<1x4x128xf32, #tpu.memory_space<vmem>>, vector<1x4x128xf32>
    %1 = vector.shape_cast %0 : vector<1x4x128xf32> to vector<4x128xf32>
    %c16_i32 = arith.constant 16 : i32
    %2 = tpu.dynamic_rotate %1 by %c16_i32 dim 1 : vector<4x128xf32>, i32 -> vector<4x128xf32>
    %c0_2 = arith.constant 0 : index
    %c0_3 = arith.constant 0 : index
    %c0_4 = arith.constant 0 : index
    %3 = vector.load %arg11[%c0_2, %c0_3, %c0_4] : memref<3x1x128xf32, #tpu.memory_space<vmem>>, vector<1x1x128xf32>
    %4 = vector.shape_cast %3 : vector<1x1x128xf32> to vector<1x128xf32>
    %5 = vector.broadcast %4 : vector<1x128xf32> to vector<4x128xf32>
    %6 = arith.mulf %2, %5 : vector<4x128xf32>
    %c112_i32 = arith.constant 112 : i32
    %7 = tpu.dynamic_rotate %1 by %c112_i32 dim 1 : vector<4x128xf32>, i32 -> vector<4x128xf32>
    %c2 = arith.constant 2 : index
    %c0_5 = arith.constant 0 : index
    %c0_6 = arith.constant 0 : index
    %8 = vector.load %arg11[%c2, %c0_5, %c0_6] : memref<3x1x128xf32, #tpu.memory_space<vmem>>, vector<1x1x128xf32>
    %9 = vector.shape_cast %8 : vector<1x1x128xf32> to vector<1x128xf32>
    %10 = vector.broadcast %9 : vector<1x128xf32> to vector<4x128xf32>
    %11 = arith.mulf %7, %10 : vector<4x128xf32>
    %12 = tpu.concatenate %6, %1, %11 in 0 : vector<4x128xf32>, vector<4x128xf32>, vector<4x128xf32> -> vector<12x128xf32>
    %13 = arith.truncf %12 : vector<12x128xf32> to vector<12x128xbf16>
    %c0_7 = arith.constant 0 : index
    %c0_8 = arith.constant 0 : index
    %14 = vector.load %arg2[%c0_7, %c0_8] : memref<8x12xbf16, #tpu.memory_space<vmem>>, vector<8x12xbf16>
    %cst = arith.constant dense<0.000000e+00> : vector<8x128xf32>
    %15 = tpu.matmul %14, %13, %cst {dimension_numbers = #tpu.dot_dimension_numbers<[1], [0], [0], [1], [0, 0, 1, 1], [], []>} : vector<8x12xbf16>, vector<12x128xbf16>, vector<8x128xf32> -> vector<8x128xf32>
    %c0_9 = arith.constant 0 : index
    %c0_10 = arith.constant 0 : index
    %16 = vector.load %arg4[%c0_9, %c0_10] : memref<8x1xf32, #tpu.memory_space<vmem>>, vector<8x1xf32>
    %17 = vector.broadcast %16 : vector<8x1xf32> to vector<8x128xf32>
    %18 = arith.addf %15, %17 : vector<8x128xf32>
    %c0_11 = arith.constant 0 : index
    %c0_12 = arith.constant 0 : index
    %19 = vector.load %arg3[%c0_11, %c0_12] : memref<8x12xbf16, #tpu.memory_space<vmem>>, vector<8x12xbf16>
    %cst_13 = arith.constant dense<0.000000e+00> : vector<8x128xf32>
    %20 = tpu.matmul %19, %13, %cst_13 {dimension_numbers = #tpu.dot_dimension_numbers<[1], [0], [0], [1], [0, 0, 1, 1], [], []>} : vector<8x12xbf16>, vector<12x128xbf16>, vector<8x128xf32> -> vector<8x128xf32>
    %c0_14 = arith.constant 0 : index
    %c0_15 = arith.constant 0 : index
    %21 = vector.load %arg5[%c0_14, %c0_15] : memref<8x1xf32, #tpu.memory_space<vmem>>, vector<8x1xf32>
    %22 = vector.broadcast %21 : vector<8x1xf32> to vector<8x128xf32>
    %23 = arith.addf %20, %22 : vector<8x128xf32>
    %cst_16 = arith.constant 0.000000e+00 : f32
    %24 = vector.broadcast %cst_16 : f32 to vector<8x128xf32>
    %25 = arith.subf %24, %23 : vector<8x128xf32>
    %26 = math.exp %25 : vector<8x128xf32>
    %cst_17 = arith.constant 1.000000e+00 : f32
    %27 = vector.broadcast %cst_17 : f32 to vector<8x128xf32>
    %28 = arith.addf %27, %26 : vector<8x128xf32>
    %29 = tpu.reciprocal %28 {approx = true} : vector<8x128xf32> -> vector<8x128xf32>
    %30 = arith.mulf %18, %29 : vector<8x128xf32>
    %c0_18 = arith.constant 0 : index
    %c0_19 = arith.constant 0 : index
    %31 = vector.load %arg6[%c0_18, %c0_19] : memref<16x8xbf16, #tpu.memory_space<vmem>>, vector<16x8xbf16>
    %32 = arith.truncf %30 : vector<8x128xf32> to vector<8x128xbf16>
    %cst_20 = arith.constant dense<0.000000e+00> : vector<16x128xf32>
    %33 = tpu.matmul %31, %32, %cst_20 {dimension_numbers = #tpu.dot_dimension_numbers<[1], [0], [0], [1], [0, 0, 1, 1], [], []>} : vector<16x8xbf16>, vector<8x128xbf16>, vector<16x128xf32> -> vector<16x128xf32>
    %cst_21 = arith.constant 0.000000e+00 : f32
    %34 = vector.broadcast %cst_21 : f32 to vector<8x128xf32>
    %35 = vector.extract_strided_slice %33 {offsets = [0, 0], sizes = [8, 128], strides = [1, 1]} : vector<16x128xf32> to vector<8x128xf32>
    %36 = arith.truncf %35 : vector<8x128xf32> to vector<8x128xbf16>
    %c0_22 = arith.constant 0 : index
    %c0_23 = arith.constant 0 : index
    %c0_24 = arith.constant 0 : index
    %37 = vector.load %arg7[%c0_22, %c0_23, %c0_24] : memref<2x128x128xbf16, #tpu.memory_space<vmem>>, vector<1x128x128xbf16>
    %38 = vector.shape_cast %37 : vector<1x128x128xbf16> to vector<128x128xbf16>
    %cst_25 = arith.constant dense<0.000000e+00> : vector<8x128xf32>
    %39 = tpu.matmul %36, %38, %cst_25 {dimension_numbers = #tpu.dot_dimension_numbers<[1], [0], [0], [1], [0, 0, 1, 1], [], []>} : vector<8x128xbf16>, vector<128x128xbf16>, vector<8x128xf32> -> vector<8x128xf32>
    %40 = arith.addf %34, %39 : vector<8x128xf32>
    %41 = vector.extract_strided_slice %33 {offsets = [8, 0], sizes = [8, 128], strides = [1, 1]} : vector<16x128xf32> to vector<8x128xf32>
    %42 = arith.truncf %41 : vector<8x128xf32> to vector<8x128xbf16>
    %c1 = arith.constant 1 : index
    %c0_26 = arith.constant 0 : index
    %c0_27 = arith.constant 0 : index
    %43 = vector.load %arg7[%c1, %c0_26, %c0_27] : memref<2x128x128xbf16, #tpu.memory_space<vmem>>, vector<1x128x128xbf16>
    %44 = vector.shape_cast %43 : vector<1x128x128xbf16> to vector<128x128xbf16>
    %cst_28 = arith.constant dense<0.000000e+00> : vector<8x128xf32>
    %45 = tpu.matmul %42, %44, %cst_28 {dimension_numbers = #tpu.dot_dimension_numbers<[1], [0], [0], [1], [0, 0, 1, 1], [], []>} : vector<8x128xbf16>, vector<128x128xbf16>, vector<8x128xf32> -> vector<8x128xf32>
    %46 = arith.addf %40, %45 : vector<8x128xf32>
    %c0_29 = arith.constant 0 : index
    %c0_30 = arith.constant 0 : index
    %47 = vector.load %arg8[%c0_29, %c0_30] : memref<8x1xf32, #tpu.memory_space<vmem>>, vector<8x1xf32>
    %48 = vector.broadcast %47 : vector<8x1xf32> to vector<8x128xf32>
    %49 = arith.addf %46, %48 : vector<8x128xf32>
    %50 = arith.addf %49, %30 : vector<8x128xf32>
    %cst_31 = arith.constant 0.000000e+00 : f32
    %51 = vector.broadcast %cst_31 : f32 to vector<8x128xf32>
    %52 = arith.maximumf %50, %51 : vector<8x128xf32>
    %c16_i32_32 = arith.constant 16 : i32
    %53 = tpu.dynamic_rotate %52 by %c16_i32_32 dim 1 : vector<8x128xf32>, i32 -> vector<8x128xf32>
    %c0_33 = arith.constant 0 : index
    %c0_34 = arith.constant 0 : index
    %c0_35 = arith.constant 0 : index
    %54 = vector.load %arg11[%c0_33, %c0_34, %c0_35] : memref<3x1x128xf32, #tpu.memory_space<vmem>>, vector<1x1x128xf32>
    %55 = vector.shape_cast %54 : vector<1x1x128xf32> to vector<1x128xf32>
    %56 = vector.broadcast %55 : vector<1x128xf32> to vector<8x128xf32>
    %57 = arith.mulf %53, %56 : vector<8x128xf32>
    %c112_i32_36 = arith.constant 112 : i32
    %58 = tpu.dynamic_rotate %52 by %c112_i32_36 dim 1 : vector<8x128xf32>, i32 -> vector<8x128xf32>
    %c2_37 = arith.constant 2 : index
    %c0_38 = arith.constant 0 : index
    %c0_39 = arith.constant 0 : index
    %59 = vector.load %arg11[%c2_37, %c0_38, %c0_39] : memref<3x1x128xf32, #tpu.memory_space<vmem>>, vector<1x1x128xf32>
    %60 = vector.shape_cast %59 : vector<1x1x128xf32> to vector<1x128xf32>
    %61 = vector.broadcast %60 : vector<1x128xf32> to vector<8x128xf32>
    %62 = arith.mulf %58, %61 : vector<8x128xf32>
    %63 = tpu.concatenate %57, %52, %62 in 0 : vector<8x128xf32>, vector<8x128xf32>, vector<8x128xf32> -> vector<24x128xf32>
    %64 = arith.truncf %63 : vector<24x128xf32> to vector<24x128xbf16>
    %c0_40 = arith.constant 0 : index
    %c0_41 = arith.constant 0 : index
    %65 = vector.load %arg9[%c0_40, %c0_41] : memref<6x24xbf16, #tpu.memory_space<vmem>>, vector<6x24xbf16>
    %cst_42 = arith.constant dense<0.000000e+00> : vector<6x128xf32>
    %66 = tpu.matmul %65, %64, %cst_42 {dimension_numbers = #tpu.dot_dimension_numbers<[1], [0], [0], [1], [0, 0, 1, 1], [], []>} : vector<6x24xbf16>, vector<24x128xbf16>, vector<6x128xf32> -> vector<6x128xf32>
    %c0_43 = arith.constant 0 : index
    %c0_44 = arith.constant 0 : index
    %67 = vector.load %arg10[%c0_43, %c0_44] : memref<6x1xf32, #tpu.memory_space<vmem>>, vector<6x1xf32>
    %68 = vector.broadcast %67 : vector<6x1xf32> to vector<6x128xf32>
    %69 = arith.addf %66, %68 : vector<6x128xf32>
    %cst_45 = arith.constant 0.000000e+00 : f32
    %70 = vector.broadcast %cst_45 : f32 to vector<6x128xf32>
    %71 = arith.maximumf %69, %70 : vector<6x128xf32>
    %c0_46 = arith.constant 0 : index
    %c0_47 = arith.constant 0 : index
    %72 = vector.load %arg14[%c0_46, %c0_47] : memref<128x8xf32, #tpu.memory_space<vmem>>, vector<128x8xf32>
    %c0_48 = arith.constant 0 : index
    %c0_49 = arith.constant 0 : index
    %73 = vector.load %arg15[%c0_48, %c0_49] : memref<8x128xf32, #tpu.memory_space<vmem>>, vector<8x128xf32>
    %cst_50 = arith.constant dense<0.000000e+00> : vector<128xf32>
    %74 = vector.multi_reduction <add>, %71, %cst_50 [0] : vector<6x128xf32> to vector<128xf32>
    %75 = vector.shape_cast %74 : vector<128xf32> to vector<1x128xf32>
    %cst_51 = arith.constant dense<0.000000e+00> : vector<1x8xf32>
    %76 = tpu.matmul %75, %72, %cst_51 {dimension_numbers = #tpu.dot_dimension_numbers<[1], [0], [0], [1], [0, 0, 1, 1], [], []>} : vector<1x128xf32>, vector<128x8xf32>, vector<1x8xf32> -> vector<1x8xf32>
    %cst_52 = arith.constant 0.010416667 : f32
    %77 = vector.broadcast %cst_52 : f32 to vector<1x8xf32>
    %78 = arith.mulf %76, %77 : vector<1x8xf32>
    %cst_53 = arith.constant dense<0.000000e+00> : vector<1x128xf32>
    %79 = tpu.matmul %78, %73, %cst_53 {dimension_numbers = #tpu.dot_dimension_numbers<[1], [0], [0], [1], [0, 0, 1, 1], [], []>} : vector<1x8xf32>, vector<8x128xf32>, vector<1x128xf32> -> vector<1x128xf32>
    %80 = vector.broadcast %79 : vector<1x128xf32> to vector<6x128xf32>
    %81 = arith.subf %71, %80 : vector<6x128xf32>
    %82 = arith.mulf %81, %81 : vector<6x128xf32>
    %cst_54 = arith.constant dense<0.000000e+00> : vector<128xf32>
    %83 = vector.multi_reduction <add>, %82, %cst_54 [0] : vector<6x128xf32> to vector<128xf32>
    %84 = vector.shape_cast %83 : vector<128xf32> to vector<1x128xf32>
    %cst_55 = arith.constant dense<0.000000e+00> : vector<1x8xf32>
    %85 = tpu.matmul %84, %72, %cst_55 {dimension_numbers = #tpu.dot_dimension_numbers<[1], [0], [0], [1], [0, 0, 1, 1], [], []>} : vector<1x128xf32>, vector<128x8xf32>, vector<1x8xf32> -> vector<1x8xf32>
    %cst_56 = arith.constant 0.010416667 : f32
    %86 = vector.broadcast %cst_56 : f32 to vector<1x8xf32>
    %87 = arith.mulf %85, %86 : vector<1x8xf32>
    %cst_57 = arith.constant dense<0.000000e+00> : vector<1x128xf32>
    %88 = tpu.matmul %87, %73, %cst_57 {dimension_numbers = #tpu.dot_dimension_numbers<[1], [0], [0], [1], [0, 0, 1, 1], [], []>} : vector<1x8xf32>, vector<8x128xf32>, vector<1x128xf32> -> vector<1x128xf32>
    %cst_58 = arith.constant 9.99999974E-6 : f32
    %89 = vector.broadcast %cst_58 : f32 to vector<1x128xf32>
    %90 = arith.addf %88, %89 : vector<1x128xf32>
    %91 = math.rsqrt %90 : vector<1x128xf32>
    %92 = vector.broadcast %91 : vector<1x128xf32> to vector<6x128xf32>
    %93 = arith.mulf %81, %92 : vector<6x128xf32>
    %c0_59 = arith.constant 0 : index
    %c0_60 = arith.constant 0 : index
    %94 = vector.load %arg12[%c0_59, %c0_60] : memref<6x128xf32, #tpu.memory_space<vmem>>, vector<6x128xf32>
    %95 = arith.mulf %93, %94 : vector<6x128xf32>
    %c0_61 = arith.constant 0 : index
    %c0_62 = arith.constant 0 : index
    %96 = vector.load %arg13[%c0_61, %c0_62] : memref<6x128xf32, #tpu.memory_space<vmem>>, vector<6x128xf32>
    %97 = arith.addf %95, %96 : vector<6x128xf32>
    %c0_63 = arith.constant 0 : index
    %c0_64 = arith.constant 0 : index
    %c0_65 = arith.constant 0 : index
    %98 = vector.load %arg16[%c0_63, %c0_64, %c0_65] : memref<1x6x128xf32, #tpu.memory_space<vmem>>, vector<1x6x128xf32>
    %99 = vector.shape_cast %98 : vector<1x6x128xf32> to vector<6x128xf32>
    %100 = vector.shape_cast %97 : vector<6x128xf32> to vector<1x6x128xf32>
    tpu.vector_store %arg16[%c0_63, %c0_64, %c0_65], %100 {strides = array<i32>} : memref<1x6x128xf32, #tpu.memory_space<vmem>>, vector<1x6x128xf32>,
    return
  }
  func.func @transform_0(%arg0: i32) -> (i32, i32, i32) {
    %c0_i32 = arith.constant 0 : i32
    %c0_i32_0 = arith.constant 0 : i32
    %c0_i32_1 = arith.constant 0 : i32
    return %arg0, %c0_i32, %c0_i32_0 : i32, i32, i32
  }
  func.func @transform_1(%arg0: i32) -> (i32, i32) {
    %c0_i32 = arith.constant 0 : i32
    %c0_i32_0 = arith.constant 0 : i32
    %c0_i32_1 = arith.constant 0 : i32
    return %c0_i32, %c0_i32_0 : i32, i32
  }
  func.func @transform_2(%arg0: i32) -> (i32, i32) {
    %c0_i32 = arith.constant 0 : i32
    %c0_i32_0 = arith.constant 0 : i32
    %c0_i32_1 = arith.constant 0 : i32
    return %c0_i32, %c0_i32_0 : i32, i32
  }
  func.func @transform_3(%arg0: i32) -> (i32, i32) {
    %c0_i32 = arith.constant 0 : i32
    %c0_i32_0 = arith.constant 0 : i32
    %c0_i32_1 = arith.constant 0 : i32
    return %c0_i32, %c0_i32_0 : i32, i32
  }
  func.func @transform_4(%arg0: i32) -> (i32, i32) {
    %c0_i32 = arith.constant 0 : i32
    %c0_i32_0 = arith.constant 0 : i32
    %c0_i32_1 = arith.constant 0 : i32
    return %c0_i32, %c0_i32_0 : i32, i32
  }
  func.func @transform_5(%arg0: i32) -> (i32, i32) {
    %c0_i32 = arith.constant 0 : i32
    %c0_i32_0 = arith.constant 0 : i32
    %c0_i32_1 = arith.constant 0 : i32
    return %c0_i32, %c0_i32_0 : i32, i32
  }
  func.func @transform_6(%arg0: i32) -> (i32, i32, i32) {
    %c0_i32 = arith.constant 0 : i32
    %c0_i32_0 = arith.constant 0 : i32
    %c0_i32_1 = arith.constant 0 : i32
    %c0_i32_2 = arith.constant 0 : i32
    return %c0_i32, %c0_i32_0, %c0_i32_1 : i32, i32, i32
  }
  func.func @transform_7(%arg0: i32) -> (i32, i32) {
    %c0_i32 = arith.constant 0 : i32
    %c0_i32_0 = arith.constant 0 : i32
    %c0_i32_1 = arith.constant 0 : i32
    return %c0_i32, %c0_i32_0 : i32, i32
  }
  func.func @transform_8(%arg0: i32) -> (i32, i32) {
    %c0_i32 = arith.constant 0 : i32
    %c0_i32_0 = arith.constant 0 : i32
    %c0_i32_1 = arith.constant 0 : i32
    return %c0_i32, %c0_i32_0 : i32, i32
  }
  func.func @transform_9(%arg0: i32) -> (i32, i32) {
    %c0_i32 = arith.constant 0 : i32
    %c0_i32_0 = arith.constant 0 : i32
    %c0_i32_1 = arith.constant 0 : i32
    return %c0_i32, %c0_i32_0 : i32, i32
  }
  func.func @transform_10(%arg0: i32) -> (i32, i32, i32) {
    %c0_i32 = arith.constant 0 : i32
    %c0_i32_0 = arith.constant 0 : i32
    %c0_i32_1 = arith.constant 0 : i32
    %c0_i32_2 = arith.constant 0 : i32
    return %c0_i32, %c0_i32_0, %c0_i32_1 : i32, i32, i32
  }
  func.func @transform_11(%arg0: i32) -> (i32, i32) {
    %c0_i32 = arith.constant 0 : i32
    %c0_i32_0 = arith.constant 0 : i32
    %c0_i32_1 = arith.constant 0 : i32
    return %c0_i32, %c0_i32_0 : i32, i32
  }
  func.func @transform_12(%arg0: i32) -> (i32, i32) {
    %c0_i32 = arith.constant 0 : i32
    %c0_i32_0 = arith.constant 0 : i32
    %c0_i32_1 = arith.constant 0 : i32
    return %c0_i32, %c0_i32_0 : i32, i32
  }
  func.func @transform_13(%arg0: i32) -> (i32, i32) {
    %c0_i32 = arith.constant 0 : i32
    %c0_i32_0 = arith.constant 0 : i32
    %c0_i32_1 = arith.constant 0 : i32
    return %c0_i32, %c0_i32_0 : i32, i32
  }
  func.func @transform_14(%arg0: i32) -> (i32, i32) {
    %c0_i32 = arith.constant 0 : i32
    %c0_i32_0 = arith.constant 0 : i32
    %c0_i32_1 = arith.constant 0 : i32
    return %c0_i32, %c0_i32_0 : i32, i32
  }
  func.func @transform_15(%arg0: i32) -> (i32, i32, i32) {
    %c0_i32 = arith.constant 0 : i32
    %c0_i32_0 = arith.constant 0 : i32
    %c0_i32_1 = arith.constant 0 : i32
    return %arg0, %c0_i32, %c0_i32_0 : i32, i32, i32
  }
}

</mosaic_0001>

<llo_original>
// kernel: tile.14
$region0: #{tile.14}
  %s0 = inlined_call_operand.vmem [shape: f32[6,8,16], index: 0, kind: input, shape index: {}]
  %s1 = inlined_call_operand.vmem [shape: f32[6,128], index: 1, kind: output, shape index: {}]
  %v2 = vld [vmem:[%s0] ss:$8 sm:$0xf]
  %s3 = smov 48
  %v4 = vld [vmem:[%s0] ss:$8 sm:%s3]
  %vm5 = vcmask 1045508
  %v6 = vsel %vm5, %v4, %v2
  %vm7 = vcmask 130048
  %8 = vst.msk [vmem:[%s1] sm:$0x3f] %vm7, %v6
  %s9 = scalar_lea.vmem %s0, 7
  %v10 = vld [vmem:[%s9] ss:$8 sm:$0xf]
  %s11 = scalar_lea.vmem %s0, 7
  %s12 = smov 48
  %v13 = vld [vmem:[%s11] ss:$8 sm:%s12]
  %vm14 = vcmask 1045508
  %v15 = vsel %vm14, %v13, %v10
  %16 = vrot.lane.b32.xlu0 %v15, 112
  %v17 = vpop.permute.xlu0 %16
  %vm18 = vcmask 1048448
  %19 = vst.msk [vmem:[%s1] sm:$0x3f] %vm18, %v17
  %s20 = scalar_lea.vmem %s0, 6
  %v21 = vld [vmem:[%s20] ss:$8 sm:$0xf]
  %s22 = scalar_lea.vmem %s0, 6
  %s23 = smov 48
  %v24 = vld [vmem:[%s22] ss:$8 sm:%s23]
  %vm25 = vcmask 1045508
  %v26 = vsel %vm25, %v24, %v21
  %27 = vrot.lane.b32.xlu0 %v26, 96
  %v28 = vpop.permute.xlu0 %27
  %vm29 = vcmask 917248
  %30 = vst.msk [vmem:[%s1] sm:$0x3f] %vm29, %v28
  %s31 = scalar_lea.vmem %s0, 5
  %v32 = vld [vmem:[%s31] ss:$8 sm:$0xf]
  %s33 = scalar_lea.vmem %s0, 5
  %s34 = smov 48
  %v35 = vld [vmem:[%s33] ss:$8 sm:%s34]
  %vm36 = vcmask 1045508
  %v37 = vsel %vm36, %v35, %v32
  %38 = vrot.lane.b32.xlu0 %v37, 80
  %v39 = vpop.permute.xlu0 %38
  %vm40 = vcmask 786048
  %41 = vst.msk [vmem:[%s1] sm:$0x3f] %vm40, %v39
  %s42 = scalar_lea.vmem %s0, 4
  %v43 = vld [vmem:[%s42] ss:$8 sm:$0xf]
  %s44 = scalar_lea.vmem %s0, 4
  %s45 = smov 48
  %v46 = vld [vmem:[%s44] ss:$8 sm:%s45]
  %vm47 = vcmask 1045508
  %v48 = vsel %vm47, %v46, %v43
  %49 = vrot.lane.b32.xlu0 %v48, 64
  %v50 = vpop.permute.xlu0 %49
  %vm51 = vcmask 654848
  %52 = vst.msk [vmem:[%s1] sm:$0x3f] %vm51, %v50
  %s53 = scalar_lea.vmem %s0, 3
  %v54 = vld [vmem:[%s53] ss:$8 sm:$0xf]
  %s55 = scalar_lea.vmem %s0, 3
  %s56 = smov 48
  %v57 = vld [vmem:[%s55] ss:$8 sm:%s56]
  %vm58 = vcmask 1045508
  %v59 = vsel %vm58, %v57, %v54
  %60 = vrot.lane.b32.xlu0 %v59, 48
  %v61 = vpop.permute.xlu0 %60
  %vm62 = vcmask 523648
  %63 = vst.msk [vmem:[%s1] sm:$0x3f] %vm62, %v61
  %s64 = scalar_lea.vmem %s0, 2
  %v65 = vld [vmem:[%s64] ss:$8 sm:$0xf]
  %s66 = scalar_lea.vmem %s0, 2
  %s67 = smov 48
  %v68 = vld [vmem:[%s66] ss:$8 sm:%s67]
  %vm69 = vcmask 1045508
  %v70 = vsel %vm69, %v68, %v65
  %71 = vrot.lane.b32.xlu0 %v70, 32
  %v72 = vpop.permute.xlu0 %71
  %vm73 = vcmask 392448
  %74 = vst.msk [vmem:[%s1] sm:$0x3f] %vm73, %v72
  %s75 = scalar_lea.vmem %s0, 1
  %v76 = vld [vmem:[%s75] ss:$8 sm:$0xf]
  %s77 = scalar_lea.vmem %s0, 1
  %s78 = smov 48
  %v79 = vld [vmem:[%s77] ss:$8 sm:%s78]
  %vm80 = vcmask 1045508
  %v81 = vsel %vm80, %v79, %v76
  %82 = vrot.lane.b32.xlu0 %v81, 16
  %v83 = vpop.permute.xlu0 %82
  %vm84 = vcmask 261248
  %85 = vst.msk [vmem:[%s1] sm:$0x3f] %vm84, %v83

// kernel: stconv_block_forward.1
$region0: #{stconv_block_forward.1}
  #allocation0 [shape = 'u32[]', space=smem, size = 0x4, offset = 0x4, fixed_abs, tag = 'smem constant byte address 0x4 - core index']
  #allocation1 [shape = 'u32[144,128]{1,0:T(1,128)}', space=vmem, size = 0x12000, scoped, tag = 'internal scratch']
  %s0 = inlined_call_operand.vmem [shape: f32[2,4,128], index: 0, kind: input, shape index: {}]
  %s1 = inlined_call_operand.vmem [shape: bf16[8,12], index: 1, kind: input, shape index: {}]
  %s2 = inlined_call_operand.vmem [shape: bf16[8,12], index: 2, kind: input, shape index: {}]
  %s3 = inlined_call_operand.vmem [shape: f32[8,1], index: 3, kind: input, shape index: {}]
  %s4 = inlined_call_operand.vmem [shape: f32[8,1], index: 4, kind: input, shape index: {}]
  %s5 = inlined_call_operand.vmem [shape: bf16[16,8], index: 5, kind: input, shape index: {}]
  %s6 = inlined_call_operand.vmem [shape: bf16[2,128,128], index: 6, kind: input, shape index: {}]
  %s7 = inlined_call_operand.vmem [shape: f32[8,1], index: 7, kind: input, shape index: {}]
  %s8 = inlined_call_operand.vmem [shape: bf16[6,24], index: 8, kind: input, shape index: {}]
  %s9 = inlined_call_operand.vmem [shape: f32[6,1], index: 9, kind: input, shape index: {}]
  %s10 = inlined_call_operand.vmem [shape: f32[3,1,128], index: 10, kind: input, shape index: {}]
  %s11 = inlined_call_operand.vmem [shape: f32[6,128], index: 11, kind: input, shape index: {}]
  %s12 = inlined_call_operand.vmem [shape: f32[6,128], index: 12, kind: input, shape index: {}]
  %s13 = inlined_call_operand.vmem [shape: f32[128,8], index: 13, kind: input, shape index: {}]
  %s14 = inlined_call_operand.vmem [shape: f32[8,128], index: 14, kind: input, shape index: {}]
  %s15 = inlined_call_operand.vmem [shape: f32[2,6,128], index: 15, kind: output, shape index: {}]
  %s16 = sld [smem:[#allocation0]]
  $region93: #{stconv_block_forward.1} parent=0
    _
  %s18 = ssub.s32 1, %s16
  %s19 = scalar_select 0, %s18, %s16
  loop: start=0, step=1, limit=4
  $region2: #{stconv_block_forward.1} parent=0 // loop_pre_header
    _
  $region3: #{stconv_block_forward.1} parent=0 // loop_header
    %s21 = sphi 0, %s25
    %p22 = scmp.ge.s32.totalorder %s21, 4
    %s31 = sphi 0, %s33
    %s34 = sphi 0, %s31
    %s35 = sphi 0, %s34
    %s51 = sphi 0, %s35
    %s55 = sphi 0, %s55
    %s57 = sphi 0, %s55
    %s58 = sphi 0, %s57
    %s72 = sphi 0, %s58
    %s76 = sphi 0, %s76
    %s78 = sphi 0, %s76
    %s79 = sphi 0, %s78
    %s93 = sphi 0, %s79
    %s97 = sphi 0, %s97
    %s99 = sphi 0, %s97
    %s100 = sphi 0, %s99
    %s114 = sphi 0, %s100
    %s118 = sphi 0, %s118
    %s120 = sphi 0, %s118
    %s121 = sphi 0, %s120
    %s135 = sphi 0, %s121
    %s139 = sphi 0, %s139
    %s141 = sphi 0, %s139
    %s142 = sphi 0, %s141
    %s156 = sphi 0, %s142
    %s160 = sphi 0, %s160
    %s162 = sphi 0, %s160
    %s163 = sphi 0, %s162
    %s177 = sphi 0, %s163
    %s181 = sphi 0, %s181
    %s183 = sphi 0, %s181
    %s184 = sphi 0, %s183
    %s198 = sphi 0, %s184
    %s202 = sphi 0, %s202
    %s204 = sphi 0, %s202
    %s205 = sphi 0, %s204
    %s219 = sphi 0, %s205
    %s223 = sphi 0, %s223
    %s225 = sphi 0, %s223
    %s226 = sphi 0, %s225
    %s240 = sphi 0, %s226
    %s244 = sphi 0, %s244
    %s246 = sphi 0, %s244
    %s247 = sphi 0, %s246
    %s261 = sphi 0, %s247
    %s265 = sphi 0, %s265
    %s267 = sphi 0, %s265
    %s268 = sphi 0, %s267
    %s282 = sphi 0, %s268
    %s286 = sphi 0, %s286
    %s288 = sphi 0, %s286
    %s289 = sphi 0, %s288
    %s303 = sphi 0, %s289
    %s307 = sphi 0, %s307
    %s309 = sphi 0, %s307
    %s310 = sphi 0, %s309
    %s324 = sphi 0, %s310
    %s328 = sphi 0, %s328
    %s330 = sphi 0, %s328
    %s331 = sphi 0, %s330
    %s345 = sphi 0, %s331
    %s351 = sphi 0, %s353
    %s354 = sphi 0, %s351
    %s355 = sphi 0, %s354
    %s371 = sphi 0, %s355
  $region4: #{stconv_block_forward.1} parent=0 // loop_header_branch
    %24 = sbr.rel (%p22) target = $region8
  $region5: #{stconv_block_forward.1} parent=0 // loop_body
    %s26 = ssub.s32 %s21, 1
    %s27 = ssub.s32 %s21, 2
    %s28 = sadd.s32 %s21, 1
    %s29 = ssub.s32 %s21, %s28
    %p30 = scmp.eq.s32.totalorder %s29, 0
    %s32 = sadd.s32 %s31, 1
    %s33 = scalar_select %p30, %s31, %s32
    %p36 = pneg %p30
    %p37 = scmp.eq.s32.totalorder %s21, 1
    %p38 = por %p36, %p37
    %p39 = scmp.ne.s32.totalorder %s31, %s34
    %p40 = scmp.eq.s32.totalorder %s21, 0
    %p41 = por %p39, %p40
    %p42 = scmp.ne.s32.totalorder %s31, %s34
    %p43 = scmp.eq.s32.totalorder %s26, 1
    %p44 = por %p42, %p43
    %p45 = scmp.ne.s32.totalorder %s34, %s35
    %p46 = scmp.eq.s32.totalorder %s26, 0
    %p47 = por %p45, %p46
    %p48 = scmp.ne.s32.totalorder %s34, %s35
    %p49 = scmp.eq.s32.totalorder %s27, 1
    %p50 = por %p48, %p49
    %p52 = scmp.ne.s32.totalorder %s35, %s51
    %p53 = scmp.eq.s32.totalorder %s27, 0
    %p54 = por %p52, %p53
    %s56 = sadd.s32 %s55, 1
    %p59 = scmp.eq.s32.totalorder %s21, 1
    %p60 = scmp.ne.s32.totalorder %s55, %s57
    %p61 = scmp.eq.s32.totalorder %s21, 0
    %p62 = por %p60, %p61
    %p63 = scmp.ne.s32.totalorder %s55, %s57
    %p64 = scmp.eq.s32.totalorder %s26, 1
    %p65 = por %p63, %p64
    %p66 = scmp.ne.s32.totalorder %s57, %s58
    %p67 = scmp.eq.s32.totalorder %s26, 0
    %p68 = por %p66, %p67
    %p69 = scmp.ne.s32.totalorder %s57, %s58
    %p70 = scmp.eq.s32.totalorder %s27, 1
    %p71 = por %p69, %p70
    %p73 = scmp.ne.s32.totalorder %s58, %s72
    %p74 = scmp.eq.s32.totalorder %s27, 0
    %p75 = por %p73, %p74
    %s77 = sadd.s32 %s76, 1
    %p80 = scmp.eq.s32.totalorder %s21, 1
    %p81 = scmp.ne.s32.totalorder %s76, %s78
    %p82 = scmp.eq.s32.totalorder %s21, 0
    %p83 = por %p81, %p82
    %p84 = scmp.ne.s32.totalorder %s76, %s78
    %p85 = scmp.eq.s32.totalorder %s26, 1
    %p86 = por %p84, %p85
    %p87 = scmp.ne.s32.totalorder %s78, %s79
    %p88 = scmp.eq.s32.totalorder %s26, 0
    %p89 = por %p87, %p88
    %p90 = scmp.ne.s32.totalorder %s78, %s79
    %p91 = scmp.eq.s32.totalorder %s27, 1
    %p92 = por %p90, %p91
    %p94 = scmp.ne.s32.totalorder %s79, %s93
    %p95 = scmp.eq.s32.totalorder %s27, 0
    %p96 = por %p94, %p95
    %s98 = sadd.s32 %s97, 1
    %p101 = scmp.eq.s32.totalorder %s21, 1
    %p102 = scmp.ne.s32.totalorder %s97, %s99
    %p103 = scmp.eq.s32.totalorder %s21, 0
    %p104 = por %p102, %p103
    %p105 = scmp.ne.s32.totalorder %s97, %s99
    %p106 = scmp.eq.s32.totalorder %s26, 1
    %p107 = por %p105, %p106
    %p108 = scmp.ne.s32.totalorder %s99, %s100
    %p109 = scmp.eq.s32.totalorder %s26, 0
    %p110 = por %p108, %p109
    %p111 = scmp.ne.s32.totalorder %s99, %s100
    %p112 = scmp.eq.s32.totalorder %s27, 1
    %p113 = por %p111, %p112
    %p115 = scmp.ne.s32.totalorder %s100, %s114
    %p116 = scmp.eq.s32.totalorder %s27, 0
    %p117 = por %p115, %p116
    %s119 = sadd.s32 %s118, 1
    %p122 = scmp.eq.s32.totalorder %s21, 1
    %p123 = scmp.ne.s32.totalorder %s118, %s120
    %p124 = scmp.eq.s32.totalorder %s21, 0
    %p125 = por %p123, %p124
    %p126 = scmp.ne.s32.totalorder %s118, %s120
    %p127 = scmp.eq.s32.totalorder %s26, 1
    %p128 = por %p126, %p127
    %p129 = scmp.ne.s32.totalorder %s120, %s121
    %p130 = scmp.eq.s32.totalorder %s26, 0
    %p131 = por %p129, %p130
    %p132 = scmp.ne.s32.totalorder %s120, %s121
    %p133 = scmp.eq.s32.totalorder %s27, 1
    %p134 = por %p132, %p133
    %p136 = scmp.ne.s32.totalorder %s121, %s135
    %p137 = scmp.eq.s32.totalorder %s27, 0
    %p138 = por %p136, %p137
    %s140 = sadd.s32 %s139, 1
    %p143 = scmp.eq.s32.totalorder %s21, 1
    %p144 = scmp.ne.s32.totalorder %s139, %s141
    %p145 = scmp.eq.s32.totalorder %s21, 0
    %p146 = por %p144, %p145
    %p147 = scmp.ne.s32.totalorder %s139, %s141
    %p148 = scmp.eq.s32.totalorder %s26, 1
    %p149 = por %p147, %p148
    %p150 = scmp.ne.s32.totalorder %s141, %s142
    %p151 = scmp.eq.s32.totalorder %s26, 0
    %p152 = por %p150, %p151
    %p153 = scmp.ne.s32.totalorder %s141, %s142
    %p154 = scmp.eq.s32.totalorder %s27, 1
    %p155 = por %p153, %p154
    %p157 = scmp.ne.s32.totalorder %s142, %s156
    %p158 = scmp.eq.s32.totalorder %s27, 0
    %p159 = por %p157, %p158
    %s161 = sadd.s32 %s160, 1
    %p164 = scmp.eq.s32.totalorder %s21, 1
    %p165 = scmp.ne.s32.totalorder %s160, %s162
    %p166 = scmp.eq.s32.totalorder %s21, 0
    %p167 = por %p165, %p166
    %p168 = scmp.ne.s32.totalorder %s160, %s162
    %p169 = scmp.eq.s32.totalorder %s26, 1
    %p170 = por %p168, %p169
    %p171 = scmp.ne.s32.totalorder %s162, %s163
    %p172 = scmp.eq.s32.totalorder %s26, 0
    %p173 = por %p171, %p172
    %p174 = scmp.ne.s32.totalorder %s162, %s163
    %p175 = scmp.eq.s32.totalorder %s27, 1
    %p176 = por %p174, %p175
    %p178 = scmp.ne.s32.totalorder %s163, %s177
    %p179 = scmp.eq.s32.totalorder %s27, 0
    %p180 = por %p178, %p179
    %s182 = sadd.s32 %s181, 1
    %p185 = scmp.eq.s32.totalorder %s21, 1
    %p186 = scmp.ne.s32.totalorder %s181, %s183
    %p187 = scmp.eq.s32.totalorder %s21, 0
    %p188 = por %p186, %p187
    %p189 = scmp.ne.s32.totalorder %s181, %s183
    %p190 = scmp.eq.s32.totalorder %s26, 1
    %p191 = por %p189, %p190
    %p192 = scmp.ne.s32.totalorder %s183, %s184
    %p193 = scmp.eq.s32.totalorder %s26, 0
    %p194 = por %p192, %p193
    %p195 = scmp.ne.s32.totalorder %s183, %s184
    %p196 = scmp.eq.s32.totalorder %s27, 1
    %p197 = por %p195, %p196
    %p199 = scmp.ne.s32.totalorder %s184, %s198
    %p200 = scmp.eq.s32.totalorder %s27, 0
    %p201 = por %p199, %p200
    %s203 = sadd.s32 %s202, 1
    %p206 = scmp.eq.s32.totalorder %s21, 1
    %p207 = scmp.ne.s32.totalorder %s202, %s204
    %p208 = scmp.eq.s32.totalorder %s21, 0
    %p209 = por %p207, %p208
    %p210 = scmp.ne.s32.totalorder %s202, %s204
    %p211 = scmp.eq.s32.totalorder %s26, 1
    %p212 = por %p210, %p211
    %p213 = scmp.ne.s32.totalorder %s204, %s205
    %p214 = scmp.eq.s32.totalorder %s26, 0
    %p215 = por %p213, %p214
    %p216 = scmp.ne.s32.totalorder %s204, %s205
    %p217 = scmp.eq.s32.totalorder %s27, 1
    %p218 = por %p216, %p217
    %p220 = scmp.ne.s32.totalorder %s205, %s219
    %p221 = scmp.eq.s32.totalorder %s27, 0
    %p222 = por %p220, %p221
    %s224 = sadd.s32 %s223, 1
    %p227 = scmp.eq.s32.totalorder %s21, 1
    %p228 = scmp.ne.s32.totalorder %s223, %s225
    %p229 = scmp.eq.s32.totalorder %s21, 0
    %p230 = por %p228, %p229
    %p231 = scmp.ne.s32.totalorder %s223, %s225
    %p232 = scmp.eq.s32.totalorder %s26, 1
    %p233 = por %p231, %p232
    %p234 = scmp.ne.s32.totalorder %s225, %s226
    %p235 = scmp.eq.s32.totalorder %s26, 0
    %p236 = por %p234, %p235
    %p237 = scmp.ne.s32.totalorder %s225, %s226
    %p238 = scmp.eq.s32.totalorder %s27, 1
    %p239 = por %p237, %p238
    %p241 = scmp.ne.s32.totalorder %s226, %s240
    %p242 = scmp.eq.s32.totalorder %s27, 0
    %p243 = por %p241, %p242
    %s245 = sadd.s32 %s244, 1
    %p248 = scmp.eq.s32.totalorder %s21, 1
    %p249 = scmp.ne.s32.totalorder %s244, %s246
    %p250 = scmp.eq.s32.totalorder %s21, 0
    %p251 = por %p249, %p250
    %p252 = scmp.ne.s32.totalorder %s244, %s246
    %p253 = scmp.eq.s32.totalorder %s26, 1
    %p254 = por %p252, %p253
    %p255 = scmp.ne.s32.totalorder %s246, %s247
    %p256 = scmp.eq.s32.totalorder %s26, 0
    %p257 = por %p255, %p256
    %p258 = scmp.ne.s32.totalorder %s246, %s247
    %p259 = scmp.eq.s32.totalorder %s27, 1
    %p260 = por %p258, %p259
    %p262 = scmp.ne.s32.totalorder %s247, %s261
    %p263 = scmp.eq.s32.totalorder %s27, 0
    %p264 = por %p262, %p263
    %s266 = sadd.s32 %s265, 1
    %p269 = scmp.eq.s32.totalorder %s21, 1
    %p270 = scmp.ne.s32.totalorder %s265, %s267
    %p271 = scmp.eq.s32.totalorder %s21, 0
    %p272 = por %p270, %p271
    %p273 = scmp.ne.s32.totalorder %s265, %s267
    %p274 = scmp.eq.s32.totalorder %s26, 1
    %p275 = por %p273, %p274
    %p276 = scmp.ne.s32.totalorder %s267, %s268
    %p277 = scmp.eq.s32.totalorder %s26, 0
    %p278 = por %p276, %p277
    %p279 = scmp.ne.s32.totalorder %s267, %s268
    %p280 = scmp.eq.s32.totalorder %s27, 1
    %p281 = por %p279, %p280
    %p283 = scmp.ne.s32.totalorder %s268, %s282
    %p284 = scmp.eq.s32.totalorder %s27, 0
    %p285 = por %p283, %p284
    %s287 = sadd.s32 %s286, 1
    %p290 = scmp.eq.s32.totalorder %s21, 1
    %p291 = scmp.ne.s32.totalorder %s286, %s288
    %p292 = scmp.eq.s32.totalorder %s21, 0
    %p293 = por %p291, %p292
    %p294 = scmp.ne.s32.totalorder %s286, %s288
    %p295 = scmp.eq.s32.totalorder %s26, 1
    %p296 = por %p294, %p295
    %p297 = scmp.ne.s32.totalorder %s288, %s289
    %p298 = scmp.eq.s32.totalorder %s26, 0
    %p299 = por %p297, %p298
    %p300 = scmp.ne.s32.totalorder %s288, %s289
    %p301 = scmp.eq.s32.totalorder %s27, 1
    %p302 = por %p300, %p301
    %p304 = scmp.ne.s32.totalorder %s289, %s303
    %p305 = scmp.eq.s32.totalorder %s27, 0
    %p306 = por %p304, %p305
    %s308 = sadd.s32 %s307, 1
    %p311 = scmp.eq.s32.totalorder %s21, 1
    %p312 = scmp.ne.s32.totalorder %s307, %s309
    %p313 = scmp.eq.s32.totalorder %s21, 0
    %p314 = por %p312, %p313
    %p315 = scmp.ne.s32.totalorder %s307, %s309
    %p316 = scmp.eq.s32.totalorder %s26, 1
    %p317 = por %p315, %p316
    %p318 = scmp.ne.s32.totalorder %s309, %s310
    %p319 = scmp.eq.s32.totalorder %s26, 0
    %p320 = por %p318, %p319
    %p321 = scmp.ne.s32.totalorder %s309, %s310
    %p322 = scmp.eq.s32.totalorder %s27, 1
    %p323 = por %p321, %p322
    %p325 = scmp.ne.s32.totalorder %s310, %s324
    %p326 = scmp.eq.s32.totalorder %s27, 0
    %p327 = por %p325, %p326
    %s329 = sadd.s32 %s328, 1
    %p332 = scmp.eq.s32.totalorder %s21, 1
    %p333 = scmp.ne.s32.totalorder %s328, %s330
    %p334 = scmp.eq.s32.totalorder %s21, 0
    %p335 = por %p333, %p334
    %p336 = scmp.ne.s32.totalorder %s328, %s330
    %p337 = scmp.eq.s32.totalorder %s26, 1
    %p338 = por %p336, %p337
    %p339 = scmp.ne.s32.totalorder %s330, %s331
    %p340 = scmp.eq.s32.totalorder %s26, 0
    %p341 = por %p339, %p340
    %p342 = scmp.ne.s32.totalorder %s330, %s331
    %p343 = scmp.eq.s32.totalorder %s27, 1
    %p344 = por %p342, %p343
    %p346 = scmp.ne.s32.totalorder %s331, %s345
    %p347 = scmp.eq.s32.totalorder %s27, 0
    %p348 = por %p346, %p347
    %s349 = ssub.s32 %s21, %s28
    %p350 = scmp.eq.s32.totalorder %s349, 0
    %s352 = sadd.s32 %s351, 1
    %s353 = scalar_select %p350, %s351, %s352
    %p356 = pneg %p350
    %p357 = scmp.eq.s32.totalorder %s21, 1
    %p358 = por %p356, %p357
    %p359 = scmp.ne.s32.totalorder %s351, %s354
    %p360 = scmp.eq.s32.totalorder %s21, 0
    %p361 = por %p359, %p360
    %p362 = scmp.ne.s32.totalorder %s351, %s354
    %p363 = scmp.eq.s32.totalorder %s26, 1
    %p364 = por %p362, %p363
    %p365 = scmp.ne.s32.totalorder %s354, %s355
    %p366 = scmp.eq.s32.totalorder %s26, 0
    %p367 = por %p365, %p366
    %p368 = scmp.ne.s32.totalorder %s354, %s355
    %p369 = scmp.eq.s32.totalorder %s27, 1
    %p370 = por %p368, %p369
    %p372 = scmp.ne.s32.totalorder %s355, %s371
    %p373 = scmp.eq.s32.totalorder %s27, 0
    %p374 = por %p372, %p373
    %p375 = scmp.le.s32.totalorder 1, %s21
    %p376 = scmp.lt.s32.totalorder %s21, 3
    %p377 = pnand %p375, %p376
    %p378 = pneg %p377
    // Predicated region
    $region9: #{stconv_block_forward.1} parent=5 // pred_check
      _
    $region10: #{stconv_block_forward.1} parent=5 // pred_check_branch
      %380 = sbr.rel (%p377) target = $region12
    $region11: #{stconv_block_forward.1} parent=5 // pred_region
      %s381 = ssub.s32 %s21, 1
      // Predicated region
      $region13: #{stconv_block_forward.1} parent=11 // pred_check
        %p382 = pneg %p68
      $region14: #{stconv_block_forward.1} parent=11 // pred_check_branch
        %384 = sbr.rel (%p382) target = $region16
      $region15: #{stconv_block_forward.1} parent=11 // pred_region
        _
      $region16: #{stconv_block_forward.1} parent=11 // pred_fallthru
        _
      // Predicated region
      $region17: #{stconv_block_forward.1} parent=11 // pred_check
        %p385 = pneg %p89
      $region18: #{stconv_block_forward.1} parent=11 // pred_check_branch
        %387 = sbr.rel (%p385) target = $region20
      $region19: #{stconv_block_forward.1} parent=11 // pred_region
        _
      $region20: #{stconv_block_forward.1} parent=11 // pred_fallthru
        _
      // Predicated region
      $region21: #{stconv_block_forward.1} parent=11 // pred_check
        %p388 = pneg %p110
      $region22: #{stconv_block_forward.1} parent=11 // pred_check_branch
        %390 = sbr.rel (%p388) target = $region24
      $region23: #{stconv_block_forward.1} parent=11 // pred_region
        _
      $region24: #{stconv_block_forward.1} parent=11 // pred_fallthru
        _
      // Predicated region
      $region25: #{stconv_block_forward.1} parent=11 // pred_check
        %p391 = pneg %p131
      $region26: #{stconv_block_forward.1} parent=11 // pred_check_branch
        %393 = sbr.rel (%p391) target = $region28
      $region27: #{stconv_block_forward.1} parent=11 // pred_region
        _
      $region28: #{stconv_block_forward.1} parent=11 // pred_fallthru
        _
      // Predicated region
      $region29: #{stconv_block_forward.1} parent=11 // pred_check
        %p394 = pneg %p152
      $region30: #{stconv_block_forward.1} parent=11 // pred_check_branch
        %396 = sbr.rel (%p394) target = $region32
      $region31: #{stconv_block_forward.1} parent=11 // pred_region
        _
      $region32: #{stconv_block_forward.1} parent=11 // pred_fallthru
        _
      // Predicated region
      $region33: #{stconv_block_forward.1} parent=11 // pred_check
        %p397 = pneg %p173
      $region34: #{stconv_block_forward.1} parent=11 // pred_check_branch
        %399 = sbr.rel (%p397) target = $region36
      $region35: #{stconv_block_forward.1} parent=11 // pred_region
        _
      $region36: #{stconv_block_forward.1} parent=11 // pred_fallthru
        _
      // Predicated region
      $region37: #{stconv_block_forward.1} parent=11 // pred_check
        %p400 = pneg %p194
      $region38: #{stconv_block_forward.1} parent=11 // pred_check_branch
        %402 = sbr.rel (%p400) target = $region40
      $region39: #{stconv_block_forward.1} parent=11 // pred_region
        _
      $region40: #{stconv_block_forward.1} parent=11 // pred_fallthru
        _
      // Predicated region
      $region41: #{stconv_block_forward.1} parent=11 // pred_check
        %p403 = pneg %p215
      $region42: #{stconv_block_forward.1} parent=11 // pred_check_branch
        %405 = sbr.rel (%p403) target = $region44
      $region43: #{stconv_block_forward.1} parent=11 // pred_region
        _
      $region44: #{stconv_block_forward.1} parent=11 // pred_fallthru
        _
      // Predicated region
      $region45: #{stconv_block_forward.1} parent=11 // pred_check
        %p406 = pneg %p236
      $region46: #{stconv_block_forward.1} parent=11 // pred_check_branch
        %408 = sbr.rel (%p406) target = $region48
      $region47: #{stconv_block_forward.1} parent=11 // pred_region
        _
      $region48: #{stconv_block_forward.1} parent=11 // pred_fallthru
        _
      // Predicated region
      $region49: #{stconv_block_forward.1} parent=11 // pred_check
        %p409 = pneg %p257
      $region50: #{stconv_block_forward.1} parent=11 // pred_check_branch
        %411 = sbr.rel (%p409) target = $region52
      $region51: #{stconv_block_forward.1} parent=11 // pred_region
        _
      $region52: #{stconv_block_forward.1} parent=11 // pred_fallthru
        _
      // Predicated region
      $region53: #{stconv_block_forward.1} parent=11 // pred_check
        %p412 = pneg %p278
      $region54: #{stconv_block_forward.1} parent=11 // pred_check_branch
        %414 = sbr.rel (%p412) target = $region56
      $region55: #{stconv_block_forward.1} parent=11 // pred_region
        _
      $region56: #{stconv_block_forward.1} parent=11 // pred_fallthru
        _
      // Predicated region
      $region57: #{stconv_block_forward.1} parent=11 // pred_check
        %p415 = pneg %p299
      $region58: #{stconv_block_forward.1} parent=11 // pred_check_branch
        %417 = sbr.rel (%p415) target = $region60
      $region59: #{stconv_block_forward.1} parent=11 // pred_region
        _
      $region60: #{stconv_block_forward.1} parent=11 // pred_fallthru
        _
      // Predicated region
      $region61: #{stconv_block_forward.1} parent=11 // pred_check
        %p418 = pneg %p320
      $region62: #{stconv_block_forward.1} parent=11 // pred_check_branch
        %420 = sbr.rel (%p418) target = $region64
      $region63: #{stconv_block_forward.1} parent=11 // pred_region
        _
      $region64: #{stconv_block_forward.1} parent=11 // pred_fallthru
        _
      // Predicated region
      $region65: #{stconv_block_forward.1} parent=11 // pred_check
        %p421 = pneg %p341
      $region66: #{stconv_block_forward.1} parent=11 // pred_check_branch
        %423 = sbr.rel (%p421) target = $region68
      $region67: #{stconv_block_forward.1} parent=11 // pred_region
        _
      $region68: #{stconv_block_forward.1} parent=11 // pred_fallthru
        _
    $region12: #{stconv_block_forward.1} parent=5 // pred_fallthru
      _
    %p424 = scmp.lt.s32.totalorder %s21, 2
    // Predicated region
    $region69: #{stconv_block_forward.1} parent=5 // pred_check
      %p425 = pneg %p424
    $region70: #{stconv_block_forward.1} parent=5 // pred_check_branch
      %427 = sbr.rel (%p425) target = $region72
    $region71: #{stconv_block_forward.1} parent=5 // pred_region
      // Predicated region
      $region73: #{stconv_block_forward.1} parent=71 // pred_check
        %p428 = pneg %p41
      $region74: #{stconv_block_forward.1} parent=71 // pred_check_branch
        %430 = sbr.rel (%p428) target = $region76
      $region75: #{stconv_block_forward.1} parent=71 // pred_region
        %p431 = scmp.lt.s32.totalorder %s21, 1
        %s432 = scalar_select %p431, %s21, 1
        %s433 = smul.addr %s432, 4
        %s434 = scalar_lea.vmem %s0, %s433
      $region76: #{stconv_block_forward.1} parent=71 // pred_fallthru
        _
    $region72: #{stconv_block_forward.1} parent=5 // pred_fallthru
      _
    %p435 = scmp.le.s32.totalorder 1, %s21
    %p436 = scmp.lt.s32.totalorder %s21, 3
    %p437 = pnand %p435, %p436
    %p438 = pneg %p437
    // Predicated region
    $region77: #{stconv_block_forward.1} parent=5 // pred_check
      _
    $region78: #{stconv_block_forward.1} parent=5 // pred_check_branch
      %440 = sbr.rel (%p437) target = $region80
    $region79: #{stconv_block_forward.1} parent=5 // pred_region
      %s441 = ssub.s32 %s21, 1
      %p442 = scmp.lt.s32.totalorder %s26, 1
      %s443 = scalar_select %p442, %s26, 1
      %s444 = smul.addr %s443, 4
      %s445 = scalar_lea.vmem %s0, %s444
      %p446 = pneg %p47
      %p447 = pneg %p44
      %p448 = pneg %p68
      %p449 = pneg %p65
      %p450 = pneg %p89
      %p451 = pneg %p86
      %p452 = pneg %p110
      %p453 = pneg %p107
      %p454 = pneg %p131
      %p455 = pneg %p128
      %p456 = pneg %p152
      %p457 = pneg %p149
      %p458 = pneg %p173
      %p459 = pneg %p170
      %p460 = pneg %p194
      %p461 = pneg %p191
      %p462 = pneg %p215
      %p463 = pneg %p212
      %p464 = pneg %p236
      %p465 = pneg %p233
      %p466 = pneg %p257
      %p467 = pneg %p254
      %p468 = pneg %p278
      %p469 = pneg %p275
      %p470 = pneg %p299
      %p471 = pneg %p296
      %p472 = pneg %p320
      %p473 = pneg %p317
      %p474 = pneg %p341
      %p475 = pneg %p338
      %p476 = pneg %p367
      %p477 = pneg %p364
      %p478 = scmp.lt.s32.totalorder %s26, 1
      %s479 = scalar_select %p478, %s26, 1
      %s480 = smul.addr %s479, 8
      %s481 = scalar_lea.vmem %s15, %s480
      %p482 = scmp.lt.s32.totalorder %s26, 1
      %s483 = scalar_select %p482, %s26, 1
      %s484 = smul.addr %s483, 4
      %s485 = scalar_lea.vmem %s0, %s484
      %p486 = scmp.lt.s32.totalorder %s26, 1
      %s487 = scalar_select %p486, %s26, 1
      %s488 = smul.addr %s487, 8
      %s489 = scalar_lea.vmem %s15, %s488
      %v491 = vld [vmem:[%s485] sm:$0xf]
      %492 = vrot.lane.b32.xlu0 %v491, 16
      %v493 = vpop.permute.xlu0 %492
      %v494 = vld [vmem:[%s10] sm:$0x1]
      %v496 = vlaneseq
      %v497 = vshrl.u32 %v496, 7
      %v498 = vsub.s32 0, %v497
      %v499 = vrot.slane %v494, %v498
      %v501 = vmul.f32 %v493, %v499
      %502 = vrot.lane.b32.xlu0 %v491, 112
      %v503 = vpop.permute.xlu0 %502
      %s504 = scalar_lea.vmem %s10, 2
      %v505 = vld [vmem:[%s504] sm:$0x1]
      %v507 = vlaneseq
      %v508 = vshrl.u32 %v507, 7
      %v509 = vsub.s32 0, %v508
      %v510 = vrot.slane %v505, %v509
      %v512 = vmul.f32 %v503, %v510
      %v514 = vrot.slane %v491, 4
      %vm516 = vcmask 1043456
      %v517 = vsel %vm516, %v501, %v514
      %v518 = vpack.c.bf16 %v512, %v517
      %v519 = vld [vmem:[%s1] sm:$0xf]
      %v520 = vld [vmem:[%s3] sm:$0xff]
      %522 = vset.pattern.permute.xlu0 0
      %523 = vperm.xlu0 %522, %v520
      %v524 = vpop.permute.xlu0 %523
      %vm526 = vcmask 97280
      %v528 = vsel %vm526, %v519, 0
      %vm530 = vcmask 1045504
      %v532 = vsel %vm530, %v518, 0
      %534 = vmatprep.subr.bf16.mxu0 0
      %535 = vmatpush1.bf16.msra.mxu0 %v532
      %536 = vmatprep.subr.bf16.mxu0 0
      %537 = vmatpush1.bf16.msra.mxu0 0
      %538 = vmatprep.subr.bf16.mxu0 0
      %539 = vmatpush1.bf16.msra.mxu0 0
      %540 = vmatprep.subr.bf16.mxu0 0
      %541 = vmatpush1.bf16.msra.mxu0 0
      %542 = vmatprep.subr.bf16.mxu0 0
      %543 = vmatpush1.bf16.msra.mxu0 0
      %544 = vmatprep.subr.bf16.mxu0 0
      %545 = vmatpush1.bf16.msra.mxu0 0
      %546 = vmatprep.subr.bf16.mxu0 0
      %547 = vmatpush1.bf16.msra.mxu0 0
      %548 = vmatprep.subr.bf16.mxu0 0
      %549 = vmatpush1.bf16.msra.mxu0 0
      %550 = vmatprep.subr.bf16.mxu0 0
      %551 = vmatpush1.bf16.msra.mxu0 0
      %552 = vmatprep.subr.bf16.mxu0 0
      %553 = vmatpush1.bf16.msra.mxu0 0
      %554 = vmatprep.subr.bf16.mxu0 0
      %555 = vmatpush1.bf16.msra.mxu0 0
      %556 = vmatprep.subr.bf16.mxu0 0
      %557 = vmatpush1.bf16.msra.mxu0 0
      %558 = vmatprep.subr.bf16.mxu0 0
      %559 = vmatpush1.bf16.msra.mxu0 0
      %560 = vmatprep.subr.bf16.mxu0 0
      %561 = vmatpush1.bf16.msra.mxu0 0
      %562 = vmatprep.subr.bf16.mxu0 0
      %563 = vmatpush1.bf16.msra.mxu0 0
      %564 = vmatprep.subr.bf16.mxu0 0
      %565 = vmatpush1.bf16.msra.mxu0 0
      %566 = vmatprep.mubr.bf16.mxu0 0
      %567 = vmatmul.mubr.bf16.gmra.mrb[0].mxu0 %v528
      %v568 = vpop.f32.mrb[0].mxu0
      %v569 = vadd.f32 %v524, %v568
      %v570 = vpop.f32.mrb[0].mxu0
      %v571 = vpop.f32.mrb[0].mxu0
      %v572 = vpop.f32.mrb[0].mxu0
      %573 = vdwg.mxu0
      %v574 = vld [vmem:[%s2] sm:$0xf]
      %v575 = vld [vmem:[%s4] sm:$0xff]
      %577 = vset.pattern.permute.xlu0 0
      %578 = vperm.xlu0 %577, %v575
      %v579 = vpop.permute.xlu0 %578
      %v582 = vsel %vm526, %v574, 0
      %584 = vmatprep.subr.bf16.mxu0 0
      %585 = vmatpush1.bf16.msra.mxu0 %v532
      %586 = vmatprep.subr.bf16.mxu0 0
      %587 = vmatpush1.bf16.msra.mxu0 0
      %588 = vmatprep.subr.bf16.mxu0 0
      %589 = vmatpush1.bf16.msra.mxu0 0
      %590 = vmatprep.subr.bf16.mxu0 0
      %591 = vmatpush1.bf16.msra.mxu0 0
      %592 = vmatprep.subr.bf16.mxu0 0
      %593 = vmatpush1.bf16.msra.mxu0 0
      %594 = vmatprep.subr.bf16.mxu0 0
      %595 = vmatpush1.bf16.msra.mxu0 0
      %596 = vmatprep.subr.bf16.mxu0 0
      %597 = vmatpush1.bf16.msra.mxu0 0
      %598 = vmatprep.subr.bf16.mxu0 0
      %599 = vmatpush1.bf16.msra.mxu0 0
      %600 = vmatprep.subr.bf16.mxu0 0
      %601 = vmatpush1.bf16.msra.mxu0 0
      %602 = vmatprep.subr.bf16.mxu0 0
      %603 = vmatpush1.bf16.msra.mxu0 0
      %604 = vmatprep.subr.bf16.mxu0 0
      %605 = vmatpush1.bf16.msra.mxu0 0
      %606 = vmatprep.subr.bf16.mxu0 0
      %607 = vmatpush1.bf16.msra.mxu0 0
      %608 = vmatprep.subr.bf16.mxu0 0
      %609 = vmatpush1.bf16.msra.mxu0 0
      %610 = vmatprep.subr.bf16.mxu0 0
      %611 = vmatpush1.bf16.msra.mxu0 0
      %612 = vmatprep.subr.bf16.mxu0 0
      %613 = vmatpush1.bf16.msra.mxu0 0
      %614 = vmatprep.subr.bf16.mxu0 0
      %615 = vmatpush1.bf16.msra.mxu0 0
      %616 = vmatprep.mubr.bf16.mxu0 0
      %617 = vmatmul.mubr.bf16.gmra.mrb[0].mxu0 %v582
      %v618 = vpop.f32.mrb[0].mxu0
      %v619 = vadd.f32 %v579, %v618
      %v620 = vpop.f32.mrb[0].mxu0
      %v621 = vpop.f32.mrb[0].mxu0
      %v622 = vpop.f32.mrb[0].mxu0
      %623 = vdwg.mxu0
      %v624 = vsub.f32 0.0, %v619
      %v625 = vmul.f32 %v624, 1.442695
      %v626 = vpow.pop %v625
      %v627 = vadd.f32 %v626, 1.0
      %v628 = vrcp.pop %v627
      %v629 = vmul.f32 %v569, %v628
      %v630 = vld [vmem:[%s5] sm:$0xf]
      %v631 = vld [vmem:[%s5 + $0x4] sm:$0xf]
      %v632 = vpack.c.bf16 %v629, %v629
      %v635 = vunpack.c.l.b16 %v630
      %v636 = vunpack.c.l.b16 %v631
      %v637 = vpack.c.b16 %v636, %v635
      %vm638 = vcmask 64512
      %v640 = vsel %vm638, %v637, 0
      %v643 = vsel %vm516, %v632, 0
      %645 = vmatprep.subr.bf16.mxu0 0
      %646 = vmatpush1.bf16.msra.mxu0 %v643
      %647 = vmatprep.subr.bf16.mxu0 0
      %648 = vmatpush1.bf16.msra.mxu0 0
      %649 = vmatprep.subr.bf16.mxu0 0
      %650 = vmatpush1.bf16.msra.mxu0 0
      %651 = vmatprep.subr.bf16.mxu0 0
      %652 = vmatpush1.bf16.msra.mxu0 0
      %653 = vmatprep.subr.bf16.mxu0 0
      %654 = vmatpush1.bf16.msra.mxu0 0
      %655 = vmatprep.subr.bf16.mxu0 0
      %656 = vmatpush1.bf16.msra.mxu0 0
      %657 = vmatprep.subr.bf16.mxu0 0
      %658 = vmatpush1.bf16.msra.mxu0 0
      %659 = vmatprep.subr.bf16.mxu0 0
      %660 = vmatpush1.bf16.msra.mxu0 0
      %661 = vmatprep.subr.bf16.mxu0 0
      %662 = vmatpush1.bf16.msra.mxu0 0
      %663 = vmatprep.subr.bf16.mxu0 0
      %664 = vmatpush1.bf16.msra.mxu0 0
      %665 = vmatprep.subr.bf16.mxu0 0
      %666 = vmatpush1.bf16.msra.mxu0 0
      %667 = vmatprep.subr.bf16.mxu0 0
      %668 = vmatpush1.bf16.msra.mxu0 0
      %669 = vmatprep.subr.bf16.mxu0 0
      %670 = vmatpush1.bf16.msra.mxu0 0
      %671 = vmatprep.subr.bf16.mxu0 0
      %672 = vmatpush1.bf16.msra.mxu0 0
      %673 = vmatprep.subr.bf16.mxu0 0
      %674 = vmatpush1.bf16.msra.mxu0 0
      %675 = vmatprep.subr.bf16.mxu0 0
      %676 = vmatpush1.bf16.msra.mxu0 0
      %677 = vmatprep.mubr.bf16.mxu0 0
      %678 = vmatmul.mubr.bf16.gmra.mrb[0].mxu0 %v640
      %v679 = vpop.f32.mrb[0].mxu0
      %v680 = vadd.f32 0.0, %v679
      %v681 = vpop.f32.mrb[0].mxu0
      %v682 = vpop.f32.mrb[0].mxu0
      %v683 = vadd.f32 0.0, %v682
      %v684 = vpop.f32.mrb[0].mxu0
      %685 = vdwg.mxu0
      %v686 = vpack.c.bf16 %v680, %v680
      %v687 = vld [vmem:[%s6] sm:$0xf]
      %v688 = vld [vmem:[%s6 + $0x4] sm:$0xf]
      %v689 = vld [vmem:[%s6 + $0x8] sm:$0xf]
      %v690 = vld [vmem:[%s6 + $0xc] sm:$0xf]
      %v691 = vld [vmem:[%s6 + $0x10] sm:$0xf]
      %v692 = vld [vmem:[%s6 + $0x14] sm:$0xf]
      %v693 = vld [vmem:[%s6 + $0x18] sm:$0xf]
      %v694 = vld [vmem:[%s6 + $0x1c] sm:$0xf]
      %v695 = vld [vmem:[%s6 + $0x20] sm:$0xf]
      %v696 = vld [vmem:[%s6 + $0x24] sm:$0xf]
      %v697 = vld [vmem:[%s6 + $0x28] sm:$0xf]
      %v698 = vld [vmem:[%s6 + $0x2c] sm:$0xf]
      %v699 = vld [vmem:[%s6 + $0x30] sm:$0xf]
      %v700 = vld [vmem:[%s6 + $0x34] sm:$0xf]
      %v701 = vld [vmem:[%s6 + $0x38] sm:$0xf]
      %v702 = vld [vmem:[%s6 + $0x3c] sm:$0xf]
      %v703 = vpack.c.bf16 %v683, %v683
      %s704 = scalar_lea.vmem %s6, 64
      %v705 = vld [vmem:[%s704] sm:$0xf]
      %v706 = vld [vmem:[%s704 + $0x4] sm:$0xf]
      %v707 = vld [vmem:[%s704 + $0x8] sm:$0xf]
      %v708 = vld [vmem:[%s704 + $0xc] sm:$0xf]
      %v709 = vld [vmem:[%s704 + $0x10] sm:$0xf]
      %v710 = vld [vmem:[%s704 + $0x14] sm:$0xf]
      %v711 = vld [vmem:[%s704 + $0x18] sm:$0xf]
      %v712 = vld [vmem:[%s704 + $0x1c] sm:$0xf]
      %v713 = vld [vmem:[%s704 + $0x20] sm:$0xf]
      %v714 = vld [vmem:[%s704 + $0x24] sm:$0xf]
      %v715 = vld [vmem:[%s704 + $0x28] sm:$0xf]
      %v716 = vld [vmem:[%s704 + $0x2c] sm:$0xf]
      %v717 = vld [vmem:[%s704 + $0x30] sm:$0xf]
      %v718 = vld [vmem:[%s704 + $0x34] sm:$0xf]
      %v719 = vld [vmem:[%s704 + $0x38] sm:$0xf]
      %v720 = vld [vmem:[%s704 + $0x3c] sm:$0xf]
      %v737 = vunpack.c.l.b16 %v705
      %v738 = vunpack.c.l.b16 %v706
      %v739 = vunpack.c.l.b16 %v707
      %v740 = vunpack.c.l.b16 %v708
      %v741 = vunpack.c.l.b16 %v709
      %v742 = vunpack.c.l.b16 %v710
      %v743 = vunpack.c.l.b16 %v711
      %v744 = vunpack.c.l.b16 %v712
      %v745 = vunpack.c.l.b16 %v713
      %v746 = vunpack.c.l.b16 %v714
      %v747 = vunpack.c.l.b16 %v715
      %v748 = vunpack.c.l.b16 %v716
      %v749 = vunpack.c.l.b16 %v717
      %v750 = vunpack.c.l.b16 %v718
      %v751 = vunpack.c.l.b16 %v719
      %v752 = vunpack.c.l.b16 %v720
      %v753 = vpack.c.b16 %v738, %v737
      %v754 = vpack.c.b16 %v740, %v739
      %v755 = vpack.c.b16 %v742, %v741
      %v756 = vpack.c.b16 %v744, %v743
      %v757 = vpack.c.b16 %v746, %v745
      %v758 = vpack.c.b16 %v748, %v747
      %v759 = vpack.c.b16 %v750, %v749
      %v760 = vpack.c.b16 %v752, %v751
      %769 = vmatprep.subr.bf16.mxu0 0
      %770 = vmatpush1.bf16.msra.mxu0 %v753
      %771 = vmatprep.subr.bf16.mxu0 0
      %772 = vmatpush1.bf16.msra.mxu0 %v754
      %773 = vmatprep.subr.bf16.mxu0 0
      %774 = vmatpush1.bf16.msra.mxu0 %v755
      %775 = vmatprep.subr.bf16.mxu0 0
      %776 = vmatpush1.bf16.msra.mxu0 %v756
      %777 = vmatprep.subr.bf16.mxu0 0
      %778 = vmatpush1.bf16.msra.mxu0 %v757
      %779 = vmatprep.subr.bf16.mxu0 0
      %780 = vmatpush1.bf16.msra.mxu0 %v758
      %781 = vmatprep.subr.bf16.mxu0 0
      %782 = vmatpush1.bf16.msra.mxu0 %v759
      %783 = vmatprep.subr.bf16.mxu0 0
      %784 = vmatpush1.bf16.msra.mxu0 %v760
      %785 = vmatprep.subr.bf16.mxu0 0
      %786 = vmatpush1.bf16.msra.mxu0 0
      %787 = vmatprep.subr.bf16.mxu0 0
      %788 = vmatpush1.bf16.msra.mxu0 0
      %789 = vmatprep.subr.bf16.mxu0 0
      %790 = vmatpush1.bf16.msra.mxu0 0
      %791 = vmatprep.subr.bf16.mxu0 0
      %792 = vmatpush1.bf16.msra.mxu0 0
      %793 = vmatprep.subr.bf16.mxu0 0
      %794 = vmatpush1.bf16.msra.mxu0 0
      %795 = vmatprep.subr.bf16.mxu0 0
      %796 = vmatpush1.bf16.msra.mxu0 0
      %797 = vmatprep.subr.bf16.mxu0 0
      %798 = vmatpush1.bf16.msra.mxu0 0
      %799 = vmatprep.subr.bf16.mxu0 0
      %800 = vmatpush1.bf16.msra.mxu0 0
      %801 = vmatprep.mubr.bf16.mxu0 0
      %802 = vmatmul.mubr.bf16.gmra.mrb[0].mxu0 %v703
      %v803 = vpop.f32.mrb[0].mxu0
      %v804 = vadd.f32 0.0, %v803
      %v805 = vpop.f32.mrb[0].mxu0
      %v806 = vpop.f32.mrb[0].mxu0
      %v807 = vpop.f32.mrb[0].mxu0
      %808 = vdwg.mxu0
      %v825 = vunpack.c.l.b16 %v687
      %v826 = vunpack.c.l.b16 %v688
      %v827 = vunpack.c.l.b16 %v689
      %v828 = vunpack.c.l.b16 %v690
      %v829 = vunpack.c.l.b16 %v691
      %v830 = vunpack.c.l.b16 %v692
      %v831 = vunpack.c.l.b16 %v693
      %v832 = vunpack.c.l.b16 %v694
      %v833 = vunpack.c.l.b16 %v695
      %v834 = vunpack.c.l.b16 %v696
      %v835 = vunpack.c.l.b16 %v697
      %v836 = vunpack.c.l.b16 %v698
      %v837 = vunpack.c.l.b16 %v699
      %v838 = vunpack.c.l.b16 %v700
      %v839 = vunpack.c.l.b16 %v701
      %v840 = vunpack.c.l.b16 %v702
      %v841 = vpack.c.b16 %v826, %v825
      %v842 = vpack.c.b16 %v828, %v827
      %v843 = vpack.c.b16 %v830, %v829
      %v844 = vpack.c.b16 %v832, %v831
      %v845 = vpack.c.b16 %v834, %v833
      %v846 = vpack.c.b16 %v836, %v835
      %v847 = vpack.c.b16 %v838, %v837
      %v848 = vpack.c.b16 %v840, %v839
      %857 = vmatprep.subr.bf16.mxu0 0
      %858 = vmatpush1.bf16.msra.mxu0 %v841
      %859 = vmatprep.subr.bf16.mxu0 0
      %860 = vmatpush1.bf16.msra.mxu0 %v842
      %861 = vmatprep.subr.bf16.mxu0 0
      %862 = vmatpush1.bf16.msra.mxu0 %v843
      %863 = vmatprep.subr.bf16.mxu0 0
      %864 = vmatpush1.bf16.msra.mxu0 %v844
      %865 = vmatprep.subr.bf16.mxu0 0
      %866 = vmatpush1.bf16.msra.mxu0 %v845
      %867 = vmatprep.subr.bf16.mxu0 0
      %868 = vmatpush1.bf16.msra.mxu0 %v846
      %869 = vmatprep.subr.bf16.mxu0 0
      %870 = vmatpush1.bf16.msra.mxu0 %v847
      %871 = vmatprep.subr.bf16.mxu0 0
      %872 = vmatpush1.bf16.msra.mxu0 %v848
      %873 = vmatprep.subr.bf16.mxu0 0
      %874 = vmatpush1.bf16.msra.mxu0 0
      %875 = vmatprep.subr.bf16.mxu0 0
      %876 = vmatpush1.bf16.msra.mxu0 0
      %877 = vmatprep.subr.bf16.mxu0 0
      %878 = vmatpush1.bf16.msra.mxu0 0
      %879 = vmatprep.subr.bf16.mxu0 0
      %880 = vmatpush1.bf16.msra.mxu0 0
      %881 = vmatprep.subr.bf16.mxu0 0
      %882 = vmatpush1.bf16.msra.mxu0 0
      %883 = vmatprep.subr.bf16.mxu0 0
      %884 = vmatpush1.bf16.msra.mxu0 0
      %885 = vmatprep.subr.bf16.mxu0 0
      %886 = vmatpush1.bf16.msra.mxu0 0
      %887 = vmatprep.subr.bf16.mxu0 0
      %888 = vmatpush1.bf16.msra.mxu0 0
      %889 = vmatprep.mubr.bf16.mxu0 0
      %890 = vmatmul.mubr.bf16.gmra.mrb[0].mxu0 %v686
      %v891 = vpop.f32.mrb[0].mxu0
      %v892 = vadd.f32 %v804, %v891
      %v893 = vpop.f32.mrb[0].mxu0
      %v894 = vpop.f32.mrb[0].mxu0
      %v895 = vpop.f32.mrb[0].mxu0
      %896 = vdwg.mxu0
      %v897 = vld [vmem:[%s7] sm:$0xff]
      %899 = vset.pattern.permute.xlu0 0
      %900 = vperm.xlu0 %899, %v897
      %v901 = vpop.permute.xlu0 %900
      %v903 = vadd.f32 %v892, %v901
      %v904 = vadd.f32 %v903, %v629
      %v905 = vmax.f32 %v904, 0.0
      %906 = vrot.lane.b32.xlu0 %v905, 16
      %v907 = vpop.permute.xlu0 %906
      %v908 = vmul.f32 %v907, %v499
      %909 = vrot.lane.b32.xlu0 %v905, 112
      %v910 = vpop.permute.xlu0 %909
      %v911 = vmul.f32 %v910, %v510
      %v912 = vpack.c.bf16 %v905, %v908
      %v913 = vpack.c.bf16 %v911, %v911
      %v914 = vld [vmem:[%s8] sm:$0x7]
      %v915 = vld [vmem:[%s9] sm:$0x3f]
      %917 = vset.pattern.permute.xlu0 0
      %918 = vperm.xlu0 %917, %v915
      %v919 = vpop.permute.xlu0 %918
      %vm921 = vcmask 195584
      %v923 = vsel %vm921, %v914, 0
      %v926 = vsel %vm516, %v913, 0
      %928 = vmatprep.subr.bf16.mxu0 0
      %929 = vmatpush1.bf16.msra.mxu0 %v912
      %930 = vmatprep.subr.bf16.mxu0 0
      %931 = vmatpush1.bf16.msra.mxu0 %v926
      %932 = vmatprep.subr.bf16.mxu0 0
      %933 = vmatpush1.bf16.msra.mxu0 0
      %934 = vmatprep.subr.bf16.mxu0 0
      %935 = vmatpush1.bf16.msra.mxu0 0
      %936 = vmatprep.subr.bf16.mxu0 0
      %937 = vmatpush1.bf16.msra.mxu0 0
      %938 = vmatprep.subr.bf16.mxu0 0
      %939 = vmatpush1.bf16.msra.mxu0 0
      %940 = vmatprep.subr.bf16.mxu0 0
      %941 = vmatpush1.bf16.msra.mxu0 0
      %942 = vmatprep.subr.bf16.mxu0 0
      %943 = vmatpush1.bf16.msra.mxu0 0
      %944 = vmatprep.subr.bf16.mxu0 0
      %945 = vmatpush1.bf16.msra.mxu0 0
      %946 = vmatprep.subr.bf16.mxu0 0
      %947 = vmatpush1.bf16.msra.mxu0 0
      %948 = vmatprep.subr.bf16.mxu0 0
      %949 = vmatpush1.bf16.msra.mxu0 0
      %950 = vmatprep.subr.bf16.mxu0 0
      %951 = vmatpush1.bf16.msra.mxu0 0
      %952 = vmatprep.subr.bf16.mxu0 0
      %953 = vmatpush1.bf16.msra.mxu0 0
      %954 = vmatprep.subr.bf16.mxu0 0
      %955 = vmatpush1.bf16.msra.mxu0 0
      %956 = vmatprep.subr.bf16.mxu0 0
      %957 = vmatpush1.bf16.msra.mxu0 0
      %958 = vmatprep.subr.bf16.mxu0 0
      %959 = vmatpush1.bf16.msra.mxu0 0
      %960 = vmatprep.mubr.bf16.mxu0 0
      %961 = vmatmul.mubr.bf16.gmra.mrb[0].mxu0 %v923
      %v962 = vpop.f32.mrb[0].mxu0
      %v963 = vadd.f32 %v919, %v962
      %v964 = vpop.f32.mrb[0].mxu0
      %v965 = vpop.f32.mrb[0].mxu0
      %v966 = vpop.f32.mrb[0].mxu0
      %967 = vdwg.mxu0
      %v968 = vmax.f32 %v963, 0.0
      %v969 = vld [vmem:[%s13] sm:$0xff]
      %v970 = vld [vmem:[%s13 + $0x8] sm:$0xff]
      %v971 = vld [vmem:[%s13 + $0x10] sm:$0xff]
      %v972 = vld [vmem:[%s13 + $0x18] sm:$0xff]
      %v973 = vld [vmem:[%s13 + $0x20] sm:$0xff]
      %v974 = vld [vmem:[%s13 + $0x28] sm:$0xff]
      %v975 = vld [vmem:[%s13 + $0x30] sm:$0xff]
      %v976 = vld [vmem:[%s13 + $0x38] sm:$0xff]
      %v977 = vld [vmem:[%s13 + $0x40] sm:$0xff]
      %v978 = vld [vmem:[%s13 + $0x48] sm:$0xff]
      %v979 = vld [vmem:[%s13 + $0x50] sm:$0xff]
      %v980 = vld [vmem:[%s13 + $0x58] sm:$0xff]
      %v981 = vld [vmem:[%s13 + $0x60] sm:$0xff]
      %v982 = vld [vmem:[%s13 + $0x68] sm:$0xff]
      %v983 = vld [vmem:[%s13 + $0x70] sm:$0xff]
      %v984 = vld [vmem:[%s13 + $0x78] sm:$0xff]
      %v985 = vld [vmem:[%s14] sm:$0xff]
      %v986 = vsel %vm530, %v968, 0.0
      %v987 = vrot.slane %v986, 4
      %v988 = vadd.f32 %v986, %v987
      %v989 = vrot.slane %v988, 2
      %v990 = vadd.f32 %v988, %v989
      %v991 = vrot.slane %v990, 1
      %v992 = vadd.f32 %v990, %v991
      %993 = vmatprep.subr.mxu0 0.0
      %994 = vmatpush1.msra.mxu0 %v969
      %995 = vmatprep.subr.mxu0 0.0
      %996 = vmatpush1.msra.mxu0 %v970
      %997 = vmatprep.subr.mxu0 0.0
      %998 = vmatpush1.msra.mxu0 %v971
      %999 = vmatprep.subr.mxu0 0.0
      %1000 = vmatpush1.msra.mxu0 %v972
      %1001 = vmatprep.subr.mxu0 0.0
      %1002 = vmatpush1.msra.mxu0 %v973
      %1003 = vmatprep.subr.mxu0 0.0
      %1004 = vmatpush1.msra.mxu0 %v974
      %1005 = vmatprep.subr.mxu0 0.0
      %1006 = vmatpush1.msra.mxu0 %v975
      %1007 = vmatprep.subr.mxu0 0.0
      %1008 = vmatpush1.msra.mxu0 %v976
      %1009 = vmatprep.subr.mxu0 0.0
      %1010 = vmatpush1.msra.mxu0 %v977
      %1011 = vmatprep.subr.mxu0 0.0
      %1012 = vmatpush1.msra.mxu0 %v978
      %1013 = vmatprep.subr.mxu0 0.0
      %1014 = vmatpush1.msra.mxu0 %v979
      %1015 = vmatprep.subr.mxu0 0.0
      %1016 = vmatpush1.msra.mxu0 %v980
      %1017 = vmatprep.subr.mxu0 0.0
      %1018 = vmatpush1.msra.mxu0 %v981
      %1019 = vmatprep.subr.mxu0 0.0
      %1020 = vmatpush1.msra.mxu0 %v982
      %1021 = vmatprep.subr.mxu0 0.0
      %1022 = vmatpush1.msra.mxu0 %v983
      %1023 = vmatprep.subr.mxu0 0.0
      %1024 = vmatpush1.msra.mxu0 %v984
      %1025 = vmatprep.subr.mxu0 0.0
      %1026 = vmatpush1.msra.mxu0 0.0
      %1027 = vmatprep.subr.mxu0 0.0
      %1028 = vmatpush1.msra.mxu0 0.0
      %1029 = vmatprep.subr.mxu0 0.0
      %1030 = vmatpush1.msra.mxu0 0.0
      %1031 = vmatprep.subr.mxu0 0.0
      %1032 = vmatpush1.msra.mxu0 0.0
      %1033 = vmatprep.subr.mxu0 0.0
      %1034 = vmatpush1.msra.mxu0 0.0
      %1035 = vmatprep.subr.mxu0 0.0
      %1036 = vmatpush1.msra.mxu0 0.0
      %1037 = vmatprep.subr.mxu0 0.0
      %1038 = vmatpush1.msra.mxu0 0.0
      %1039 = vmatprep.subr.mxu0 0.0
      %1040 = vmatpush1.msra.mxu0 0.0
      %1041 = vmatprep.subr.mxu0 0.0
      %1042 = vmatpush1.msra.mxu0 0.0
      %1043 = vmatprep.subr.mxu0 0.0
      %1044 = vmatpush1.msra.mxu0 0.0
      %1045 = vmatprep.subr.mxu0 0.0
      %1046 = vmatpush1.msra.mxu0 0.0
      %1047 = vmatprep.subr.mxu0 0.0
      %1048 = vmatpush1.msra.mxu0 0.0
      %1049 = vmatprep.subr.mxu0 0.0
      %1050 = vmatpush1.msra.mxu0 0.0
      %1051 = vmatprep.subr.mxu0 0.0
      %1052 = vmatpush1.msra.mxu0 0.0
      %1053 = vmatprep.subr.mxu0 0.0
      %1054 = vmatpush1.msra.mxu0 0.0
      %1055 = vmatprep.subr.mxu0 0.0
      %1056 = vmatpush1.msra.mxu0 0.0
      %1057 = vmatprep.mubr.f32.mxu0 0.0
      %1058 = vmatmul.mubr.f32.gmra.mrb[0].mxu0 %v992
      %v1059 = vpop.f32.mrb[0].mxu0
      %v1060 = vadd.f32 0.0, %v1059
      %v1061 = vpop.f32.mrb[0].mxu0
      %1062 = vdwg.mxu0
      %v1063 = vmul.f32 %v1060, 0.010416667
      %v1065 = vsel %vm638, %v1063, 0
      %1067 = vmatprep.subr.mxu0 0.0
      %1068 = vmatpush1.msra.mxu0 %v985
      %1069 = vmatprep.subr.mxu0 0.0
      %1070 = vmatpush1.msra.mxu0 0.0
      %1071 = vmatprep.subr.mxu0 0.0
      %1072 = vmatpush1.msra.mxu0 0.0
      %1073 = vmatprep.subr.mxu0 0.0
      %1074 = vmatpush1.msra.mxu0 0.0
      %1075 = vmatprep.subr.mxu0 0.0
      %1076 = vmatpush1.msra.mxu0 0.0
      %1077 = vmatprep.subr.mxu0 0.0
      %1078 = vmatpush1.msra.mxu0 0.0
      %1079 = vmatprep.subr.mxu0 0.0
      %1080 = vmatpush1.msra.mxu0 0.0
      %1081 = vmatprep.subr.mxu0 0.0
      %1082 = vmatpush1.msra.mxu0 0.0
      %1083 = vmatprep.subr.mxu0 0.0
      %1084 = vmatpush1.msra.mxu0 0.0
      %1085 = vmatprep.subr.mxu0 0.0
      %1086 = vmatpush1.msra.mxu0 0.0
      %1087 = vmatprep.subr.mxu0 0.0
      %1088 = vmatpush1.msra.mxu0 0.0
      %1089 = vmatprep.subr.mxu0 0.0
      %1090 = vmatpush1.msra.mxu0 0.0
      %1091 = vmatprep.subr.mxu0 0.0
      %1092 = vmatpush1.msra.mxu0 0.0
      %1093 = vmatprep.subr.mxu0 0.0
      %1094 = vmatpush1.msra.mxu0 0.0
      %1095 = vmatprep.subr.mxu0 0.0
      %1096 = vmatpush1.msra.mxu0 0.0
      %1097 = vmatprep.subr.mxu0 0.0
      %1098 = vmatpush1.msra.mxu0 0.0
      %1099 = vmatprep.subr.mxu0 0.0
      %1100 = vmatpush1.msra.mxu0 0.0
      %1101 = vmatprep.subr.mxu0 0.0
      %1102 = vmatpush1.msra.mxu0 0.0
      %1103 = vmatprep.subr.mxu0 0.0
      %1104 = vmatpush1.msra.mxu0 0.0
      %1105 = vmatprep.subr.mxu0 0.0
      %1106 = vmatpush1.msra.mxu0 0.0
      %1107 = vmatprep.subr.mxu0 0.0
      %1108 = vmatpush1.msra.mxu0 0.0
      %1109 = vmatprep.subr.mxu0 0.0
      %1110 = vmatpush1.msra.mxu0 0.0
      %1111 = vmatprep.subr.mxu0 0.0
      %1112 = vmatpush1.msra.mxu0 0.0
      %1113 = vmatprep.subr.mxu0 0.0
      %1114 = vmatpush1.msra.mxu0 0.0
      %1115 = vmatprep.subr.mxu0 0.0
      %1116 = vmatpush1.msra.mxu0 0.0
      %1117 = vmatprep.subr.mxu0 0.0
      %1118 = vmatpush1.msra.mxu0 0.0
      %1119 = vmatprep.subr.mxu0 0.0
      %1120 = vmatpush1.msra.mxu0 0.0
      %1121 = vmatprep.subr.mxu0 0.0
      %1122 = vmatpush1.msra.mxu0 0.0
      %1123 = vmatprep.subr.mxu0 0.0
      %1124 = vmatpush1.msra.mxu0 0.0
      %1125 = vmatprep.subr.mxu0 0.0
      %1126 = vmatpush1.msra.mxu0 0.0
      %1127 = vmatprep.subr.mxu0 0.0
      %1128 = vmatpush1.msra.mxu0 0.0
      %1129 = vmatprep.subr.mxu0 0.0
      %1130 = vmatpush1.msra.mxu0 0.0
      %1131 = vmatprep.mubr.f32.mxu0 0.0
      %1132 = vmatmul.mubr.f32.gmra.mrb[0].mxu0 %v1065
      %v1133 = vpop.f32.mrb[0].mxu0
      %v1134 = vadd.f32 0.0, %v1133
      %v1135 = vpop.f32.mrb[0].mxu0
      %1136 = vdwg.mxu0
      %v1137 = vlaneseq
      %v1138 = vshrl.u32 %v1137, 7
      %v1139 = vsub.s32 0, %v1138
      %v1140 = vrot.slane %v1134, %v1139
      %v1141 = vsub.f32 %v968, %v1140
      %v1142 = vmul.f32 %v1141, %v1141
      %v1143 = vsel %vm530, %v1142, 0.0
      %v1144 = vrot.slane %v1143, 4
      %v1145 = vadd.f32 %v1143, %v1144
      %v1146 = vrot.slane %v1145, 2
      %v1147 = vadd.f32 %v1145, %v1146
      %v1148 = vrot.slane %v1147, 1
      %v1149 = vadd.f32 %v1147, %v1148
      %1150 = vmatprep.subr.mxu0 0.0
      %1151 = vmatpush1.msra.mxu0 %v969
      %1152 = vmatprep.subr.mxu0 0.0
      %1153 = vmatpush1.msra.mxu0 %v970
      %1154 = vmatprep.subr.mxu0 0.0
      %1155 = vmatpush1.msra.mxu0 %v971
      %1156 = vmatprep.subr.mxu0 0.0
      %1157 = vmatpush1.msra.mxu0 %v972
      %1158 = vmatprep.subr.mxu0 0.0
      %1159 = vmatpush1.msra.mxu0 %v973
      %1160 = vmatprep.subr.mxu0 0.0
      %1161 = vmatpush1.msra.mxu0 %v974
      %1162 = vmatprep.subr.mxu0 0.0
      %1163 = vmatpush1.msra.mxu0 %v975
      %1164 = vmatprep.subr.mxu0 0.0
      %1165 = vmatpush1.msra.mxu0 %v976
      %1166 = vmatprep.subr.mxu0 0.0
      %1167 = vmatpush1.msra.mxu0 %v977
      %1168 = vmatprep.subr.mxu0 0.0
      %1169 = vmatpush1.msra.mxu0 %v978
      %1170 = vmatprep.subr.mxu0 0.0
      %1171 = vmatpush1.msra.mxu0 %v979
      %1172 = vmatprep.subr.mxu0 0.0
      %1173 = vmatpush1.msra.mxu0 %v980
      %1174 = vmatprep.subr.mxu0 0.0
      %1175 = vmatpush1.msra.mxu0 %v981
      %1176 = vmatprep.subr.mxu0 0.0
      %1177 = vmatpush1.msra.mxu0 %v982
      %1178 = vmatprep.subr.mxu0 0.0
      %1179 = vmatpush1.msra.mxu0 %v983
      %1180 = vmatprep.subr.mxu0 0.0
      %1181 = vmatpush1.msra.mxu0 %v984
      %1182 = vmatprep.subr.mxu0 0.0
      %1183 = vmatpush1.msra.mxu0 0.0
      %1184 = vmatprep.subr.mxu0 0.0
      %1185 = vmatpush1.msra.mxu0 0.0
      %1186 = vmatprep.subr.mxu0 0.0
      %1187 = vmatpush1.msra.mxu0 0.0
      %1188 = vmatprep.subr.mxu0 0.0
      %1189 = vmatpush1.msra.mxu0 0.0
      %1190 = vmatprep.subr.mxu0 0.0
      %1191 = vmatpush1.msra.mxu0 0.0
      %1192 = vmatprep.subr.mxu0 0.0
      %1193 = vmatpush1.msra.mxu0 0.0
      %1194 = vmatprep.subr.mxu0 0.0
      %1195 = vmatpush1.msra.mxu0 0.0
      %1196 = vmatprep.subr.mxu0 0.0
      %1197 = vmatpush1.msra.mxu0 0.0
      %1198 = vmatprep.subr.mxu0 0.0
      %1199 = vmatpush1.msra.mxu0 0.0
      %1200 = vmatprep.subr.mxu0 0.0
      %1201 = vmatpush1.msra.mxu0 0.0
      %1202 = vmatprep.subr.mxu0 0.0
      %1203 = vmatpush1.msra.mxu0 0.0
      %1204 = vmatprep.subr.mxu0 0.0
      %1205 = vmatpush1.msra.mxu0 0.0
      %1206 = vmatprep.subr.mxu0 0.0
      %1207 = vmatpush1.msra.mxu0 0.0
      %1208 = vmatprep.subr.mxu0 0.0
      %1209 = vmatpush1.msra.mxu0 0.0
      %1210 = vmatprep.subr.mxu0 0.0
      %1211 = vmatpush1.msra.mxu0 0.0
      %1212 = vmatprep.subr.mxu0 0.0
      %1213 = vmatpush1.msra.mxu0 0.0
      %1214 = vmatprep.mubr.f32.mxu0 0.0
      %1215 = vmatmul.mubr.f32.gmra.mrb[0].mxu0 %v1149
      %v1216 = vpop.f32.mrb[0].mxu0
      %v1217 = vadd.f32 0.0, %v1216
      %v1218 = vpop.f32.mrb[0].mxu0
      %1219 = vdwg.mxu0
      %v1220 = vmul.f32 %v1217, 0.010416667
      %v1222 = vsel %vm638, %v1220, 0
      %1224 = vmatprep.subr.mxu0 0.0
      %1225 = vmatpush1.msra.mxu0 %v985
      %1226 = vmatprep.subr.mxu0 0.0
      %1227 = vmatpush1.msra.mxu0 0.0
      %1228 = vmatprep.subr.mxu0 0.0
      %1229 = vmatpush1.msra.mxu0 0.0
      %1230 = vmatprep.subr.mxu0 0.0
      %1231 = vmatpush1.msra.mxu0 0.0
      %1232 = vmatprep.subr.mxu0 0.0
      %1233 = vmatpush1.msra.mxu0 0.0
      %1234 = vmatprep.subr.mxu0 0.0
      %1235 = vmatpush1.msra.mxu0 0.0
      %1236 = vmatprep.subr.mxu0 0.0
      %1237 = vmatpush1.msra.mxu0 0.0
      %1238 = vmatprep.subr.mxu0 0.0
      %1239 = vmatpush1.msra.mxu0 0.0
      %1240 = vmatprep.subr.mxu0 0.0
      %1241 = vmatpush1.msra.mxu0 0.0
      %1242 = vmatprep.subr.mxu0 0.0
      %1243 = vmatpush1.msra.mxu0 0.0
      %1244 = vmatprep.subr.mxu0 0.0
      %1245 = vmatpush1.msra.mxu0 0.0
      %1246 = vmatprep.subr.mxu0 0.0
      %1247 = vmatpush1.msra.mxu0 0.0
      %1248 = vmatprep.subr.mxu0 0.0
      %1249 = vmatpush1.msra.mxu0 0.0
      %1250 = vmatprep.subr.mxu0 0.0
      %1251 = vmatpush1.msra.mxu0 0.0
      %1252 = vmatprep.subr.mxu0 0.0
      %1253 = vmatpush1.msra.mxu0 0.0
      %1254 = vmatprep.subr.mxu0 0.0
      %1255 = vmatpush1.msra.mxu0 0.0
      %1256 = vmatprep.subr.mxu0 0.0
      %1257 = vmatpush1.msra.mxu0 0.0
      %1258 = vmatprep.subr.mxu0 0.0
      %1259 = vmatpush1.msra.mxu0 0.0
      %1260 = vmatprep.subr.mxu0 0.0
      %1261 = vmatpush1.msra.mxu0 0.0
      %1262 = vmatprep.subr.mxu0 0.0
      %1263 = vmatpush1.msra.mxu0 0.0
      %1264 = vmatprep.subr.mxu0 0.0
      %1265 = vmatpush1.msra.mxu0 0.0
      %1266 = vmatprep.subr.mxu0 0.0
      %1267 = vmatpush1.msra.mxu0 0.0
      %1268 = vmatprep.subr.mxu0 0.0
      %1269 = vmatpush1.msra.mxu0 0.0
      %1270 = vmatprep.subr.mxu0 0.0
      %1271 = vmatpush1.msra.mxu0 0.0
      %1272 = vmatprep.subr.mxu0 0.0
      %1273 = vmatpush1.msra.mxu0 0.0
      %1274 = vmatprep.subr.mxu0 0.0
      %1275 = vmatpush1.msra.mxu0 0.0
      %1276 = vmatprep.subr.mxu0 0.0
      %1277 = vmatpush1.msra.mxu0 0.0
      %1278 = vmatprep.subr.mxu0 0.0
      %1279 = vmatpush1.msra.mxu0 0.0
      %1280 = vmatprep.subr.mxu0 0.0
      %1281 = vmatpush1.msra.mxu0 0.0
      %1282 = vmatprep.subr.mxu0 0.0
      %1283 = vmatpush1.msra.mxu0 0.0
      %1284 = vmatprep.subr.mxu0 0.0
      %1285 = vmatpush1.msra.mxu0 0.0
      %1286 = vmatprep.subr.mxu0 0.0
      %1287 = vmatpush1.msra.mxu0 0.0
      %1288 = vmatprep.mubr.f32.mxu0 0.0
      %1289 = vmatmul.mubr.f32.gmra.mrb[0].mxu0 %v1222
      %v1290 = vpop.f32.mrb[0].mxu0
      %v1291 = vadd.f32 1e-05, %v1290
      %v1292 = vpop.f32.mrb[0].mxu0
      %1293 = vdwg.mxu0
      %v1294 = vrsqrt.pop %v1291
      %v1295 = vlaneseq
      %v1296 = vshrl.u32 %v1295, 7
      %v1297 = vsub.s32 0, %v1296
      %v1298 = vrot.slane %v1294, %v1297
      %v1299 = vmul.f32 %v1141, %v1298
      %v1300 = vld [vmem:[%s11] sm:$0x3f]
      %v1301 = vmul.f32 %v1299, %v1300
      %v1302 = vld [vmem:[%s12] sm:$0x3f]
      %v1303 = vadd.f32 %v1301, %v1302
      %1304 = vst [vmem:[%s489] sm:$0x3f] %v1303
      %p1305 = scmp.lt.s32.totalorder %s26, 1
      %s1306 = scalar_select %p1305, %s26, 1
      %s1307 = smul.addr %s1306, 8
      %s1308 = scalar_lea.vmem %s15, %s1307
      // Predicated region
      $region81: #{stconv_block_forward.1} parent=79 // pred_check
        %p1309 = pneg %p364
      $region82: #{stconv_block_forward.1} parent=79 // pred_check_branch
        %1311 = sbr.rel (%p1309) target = $region84
      $region83: #{stconv_block_forward.1} parent=79 // pred_region
        _
      $region84: #{stconv_block_forward.1} parent=79 // pred_fallthru
        _
    $region80: #{stconv_block_forward.1} parent=5 // pred_fallthru
      _
    %p1312 = scmp.le.s32.totalorder 2, %s21
    // Predicated region
    $region85: #{stconv_block_forward.1} parent=5 // pred_check
      %p1313 = pneg %p1312
    $region86: #{stconv_block_forward.1} parent=5 // pred_check_branch
      %1315 = sbr.rel (%p1313) target = $region88
    $region87: #{stconv_block_forward.1} parent=5 // pred_region
      %s1316 = ssub.s32 %s21, 2
      // Predicated region
      $region89: #{stconv_block_forward.1} parent=87 // pred_check
        %p1317 = pneg %p370
      $region90: #{stconv_block_forward.1} parent=87 // pred_check_branch
        %1319 = sbr.rel (%p1317) target = $region92
      $region91: #{stconv_block_forward.1} parent=87 // pred_region
        %p1320 = scmp.lt.s32.totalorder %s27, 1
        %s1321 = scalar_select %p1320, %s27, 1
        %s1322 = smul.addr %s1321, 8
        %s1323 = scalar_lea.vmem %s15, %s1322
      $region92: #{stconv_block_forward.1} parent=87 // pred_fallthru
        _
    $region88: #{stconv_block_forward.1} parent=5 // pred_fallthru
      _
  $region6: #{stconv_block_forward.1} parent=0 // loop_footer
    %s25 = sadd.s32 1, %s21
  $region7: #{stconv_block_forward.1} parent=0 // loop_footer_branch
    %20 = sbr.rel target = $region3
  $region8: #{stconv_block_forward.1} parent=0 // loop_exit
    _

</llo_original>
